<compile_context>
chip_gen: v7x
topology: tpu7x:2x2x1
jax: 0.10.0
libtpu: 0.0.40
codegen_flags: <defaults>
</compile_context>

<pallas_src>
import functools

import jax
import jax.numpy as jnp
from jax.experimental import pallas as pl
from jax.experimental.pallas import tpu as pltpu


_VMEM = pl.BlockSpec(memory_space=pltpu.MemorySpace.VMEM)

# Row tile for the full-size (N x N) GCN levels.  Multiple of 128 so blocked
# (C, tm) outputs stay lane-aligned; sized so the double-buffered (tm, N) A
# stream fits comfortably inside v7x's 64 MiB VMEM for large N.
# TODO(synk): bump to 512/1024 on v5e/v6e (128 MiB VMEM) for very large N.
_ROW_TILE = 256


def _round_up(n, m):
    return ((n + m - 1) // m) * m


def _tile_and_pad(n):
    """Pick a row tile (multiple of 8, ideally 128-aligned) and padded extent."""
    tm = _ROW_TILE if n >= _ROW_TILE else _round_up(n, 8)
    return tm, _round_up(n, tm)


def _pad2(x, rows, cols):
    return jnp.pad(x, ((0, rows - x.shape[0]), (0, cols - x.shape[1])))


def _mosaic_params(workset_bytes, parallel_rows=False):
    # Explicit scoped-VMEM limit sized to the working set (+ headroom), so the
    # default 16/32 MiB limits never cause spurious OOMs.
    limit = int(max(16 * 2**20, min(128 * 2**20, workset_bytes + 4 * 2**20)))
    if parallel_rows:
        return pltpu.CompilerParams(dimension_semantics=("parallel",),
                                    vmem_limit_bytes=limit)
    return pltpu.CompilerParams(vmem_limit_bytes=limit)


# -----------------------------------------------------------------------------
# In-kernel GCN math (feature-major)
# -----------------------------------------------------------------------------
def _gcn_tile_fm(a_tile, s_tile, sx_full, sx_tile, W, b):
    """Feature-major GCN on one row tile of A.

       out[c, n] = relu( sum_k W[c, k] * AX[k, n] + b[c] )
       AX[k, n]  = s_n * ( sum_j A[n, j] * s_j * x[j, k]  +  2 * s_n * x[n, k] )

       a_tile : (tm, Np)  raw adjacency rows for this tile's nodes
       s_tile : (1, tm)   rsqrt(deg+2) for this tile's nodes
       sx_full: (cin, Np) column-scaled features s_j * x[j, c]
       sx_tile: (cin, tm) this tile's columns of sx_full
    """
    ax = jax.lax.dot_general(
        sx_full.astype(a_tile.dtype), a_tile,
        dimension_numbers=(((1,), (1,)), ((), ())),
        preferred_element_type=jnp.float32)                      # (cin, tm)
    ax = s_tile * (ax + 2.0 * sx_tile)
    h = jax.lax.dot_general(
        W, ax, dimension_numbers=(((1,), (0,)), ((), ())),
        preferred_element_type=jnp.float32) + b                  # (cout, tm)
    return jnp.maximum(h, 0.0)


def _make_down_tiled_kernel(cin):
    """Row-tiled fused GCN (no residual) + gPool projection.
       Param pack columns: [0:cin]=W, [cin]=b, [cin+1]=wp, [cin+2]=bp."""
    def kernel(a_ref, s_ref, sxf_ref, sxt_ref, pk_ref, h_ref, sc_ref):
        W = pk_ref[:, 0:cin]
        b = pk_ref[:, cin:cin + 1]
        wp = pk_ref[:, cin + 1:cin + 2]
        bp = pk_ref[0:1, cin + 2:cin + 3]
        h = _gcn_tile_fm(a_ref[...], s_ref[...], sxf_ref[...], sxt_ref[...], W, b)
        h_ref[...] = h
        # gPool projection on the VPU (cout is tiny): lane-dense (1, tm) scores.
        sc_ref[...] = jnp.sum(wp * h, axis=0, keepdims=True) + bp
    return kernel


def _make_up_tiled_kernel(cin):
    """Row-tiled GCN with the skip-connection residual add fused in."""
    def kernel(a_ref, s_ref, sxf_ref, sxt_ref, res_ref, pk_ref, h_ref):
        W = pk_ref[:, 0:cin]
        b = pk_ref[:, cin:cin + 1]
        h_ref[...] = _gcn_tile_fm(a_ref[...], s_ref[...], sxf_ref[...],
                                  sxt_ref[...], W, b) + res_ref[...]
    return kernel


def _pooled_gcn_core(ar, ac, x_fm, W, b):
    """A_pooled = ar @ ac, then symmetric-normalized GCN (feature-major)."""
    a = jnp.dot(ar, ac, preferred_element_type=jnp.float32)        # (kp, kp)
    # Lane-dense row degrees via a ones-matmul (no sublane->lane relayout):
    # deg[0, n] = sum_j a[n, j].
    ones = jnp.ones((1, a.shape[0]), jnp.float32)
    deg = jax.lax.dot_general(ones, a, (((1,), (1,)), ((), ())),
                              preferred_element_type=jnp.float32)  # (1, kp)
    s = jax.lax.rsqrt(deg + 2.0)                                   # (1, kp)
    sx = x_fm * s                                                  # (cin, kp)
    ax = jax.lax.dot_general(sx, a, (((1,), (1,)), ((), ())),
                             preferred_element_type=jnp.float32)   # (cin, kp)
    ax = s * (ax + 2.0 * sx)
    h = jax.lax.dot_general(W, ax, (((1,), (0,)), ((), ())),
                            preferred_element_type=jnp.float32) + b
    return a, s, jnp.maximum(h, 0.0)


def _make_pooled_down_kernel(cin):
    """Fused: pooled-adjacency matmul + GCN + gPool projection, and emits the
       degree scale s so the matching up level re-uses it (hoisted for tiling)."""
    def kernel(ar_ref, ac_ref, x_ref, pk_ref, a_ref, s_ref, h_ref, sc_ref):
        W = pk_ref[:, 0:cin]
        b = pk_ref[:, cin:cin + 1]
        wp = pk_ref[:, cin + 1:cin + 2]
        bp = pk_ref[0:1, cin + 2:cin + 3]
        a, s, h = _pooled_gcn_core(ar_ref[...], ac_ref[...], x_ref[...], W, b)
        a_ref[...] = a
        s_ref[...] = s
        h_ref[...] = h
        sc_ref[...] = jnp.sum(wp * h, axis=0, keepdims=True) + bp
    return kernel


def _make_pooled_bottom_kernel(cin):
    """Fused: pooled-adjacency matmul + GCN (no residual, no projection)."""
    def kernel(ar_ref, ac_ref, x_ref, pk_ref, h_ref):
        W = pk_ref[:, 0:cin]
        b = pk_ref[:, cin:cin + 1]
        _, _, h = _pooled_gcn_core(ar_ref[...], ac_ref[...], x_ref[...], W, b)
        h_ref[...] = h
    return kernel


# -----------------------------------------------------------------------------
# Param packing (one small VMEM buffer per call)
# -----------------------------------------------------------------------------
def _pack_gcn_params_fm(W, b):
    cout = W.shape[0]
    return jnp.concatenate([W, b.reshape(cout, 1)], axis=1).astype(jnp.float32)


def _pack_down_params_fm(W, b, Wp, bp):
    cout = W.shape[0]
    return jnp.concatenate(
        [W, b.reshape(cout, 1), Wp.reshape(cout, 1),
         jnp.broadcast_to(bp.reshape(1, 1), (cout, 1))],
        axis=1).astype(jnp.float32)


# -----------------------------------------------------------------------------
# pallas_call wrappers (5 calls per forward)
# -----------------------------------------------------------------------------
def gcn_pool_tiled(A_p, s_row, sx_fm, W, b, Wp, bp, tm):
    """Row-tiled fused GCN + gPool projection over padded (Np, Np) adjacency.
    Returns feature-major H (cout, Np) and lane-dense scores (1, Np)."""
    Np = A_p.shape[0]
    cin = sx_fm.shape[0]
    cout = W.shape[0]
    pack = _pack_down_params_fm(W, b, Wp, bp)
    ws = (2 * tm * Np * A_p.dtype.itemsize + cin * Np * 4
          + 2 * tm * (cin + cout + 2) * 4 + 4096)
    return pl.pallas_call(
        _make_down_tiled_kernel(cin),
        grid=(Np // tm,),
        in_specs=[
            pl.BlockSpec((tm, Np), lambda i: (i, 0)),          # A row tile (stream)
            pl.BlockSpec((1, tm), lambda i: (0, i)),           # s for this tile
            pl.BlockSpec((cin, Np), lambda i: (0, 0)),         # s*X, resident
            pl.BlockSpec((cin, tm), lambda i: (0, i)),         # s*X, tile columns
            pl.BlockSpec((cout, cin + 3), lambda i: (0, 0)),   # packed params
        ],
        out_specs=(pl.BlockSpec((cout, tm), lambda i: (0, i)),
                   pl.BlockSpec((1, tm), lambda i: (0, i))),
        out_shape=(jax.ShapeDtypeStruct((cout, Np), jnp.float32),
                   jax.ShapeDtypeStruct((1, Np), jnp.float32)),
        compiler_params=_mosaic_params(ws, parallel_rows=True),
    )(A_p, s_row, sx_fm, sx_fm, pack)


def gcn_res_tiled(A_p, s_row, sx_fm, res_fm, W, b, tm):
    """Row-tiled GCN with fused skip residual. Returns feature-major (cout, Np)."""
    Np = A_p.shape[0]
    cin = sx_fm.shape[0]
    cout = W.shape[0]
    pack = _pack_gcn_params_fm(W, b)
    ws = (2 * tm * Np * A_p.dtype.itemsize + cin * Np * 4
          + 2 * tm * (cin + 2 * cout + 1) * 4 + 4096)
    return pl.pallas_call(
        _make_up_tiled_kernel(cin),
        grid=(Np // tm,),
        in_specs=[
            pl.BlockSpec((tm, Np), lambda i: (i, 0)),
            pl.BlockSpec((1, tm), lambda i: (0, i)),
            pl.BlockSpec((cin, Np), lambda i: (0, 0)),
            pl.BlockSpec((cin, tm), lambda i: (0, i)),
            pl.BlockSpec((cout, tm), lambda i: (0, i)),        # residual tile
            pl.BlockSpec((cout, cin + 1), lambda i: (0, 0)),
        ],
        out_specs=pl.BlockSpec((cout, tm), lambda i: (0, i)),
        out_shape=jax.ShapeDtypeStruct((cout, Np), jnp.float32),
        compiler_params=_mosaic_params(ws, parallel_rows=True),
    )(A_p, s_row, sx_fm, sx_fm, res_fm, pack)


def pooled_gcn_pool(A_rows, A_cols, x_fm, W, b, Wp, bp):
    """Monolithic: A_pooled = A_rows @ A_cols, GCN, gPool projection.
    Also emits s(A_pooled) so the matching up level re-uses the degree pass."""
    kp, n = A_rows.shape
    cin = x_fm.shape[0]
    cout = W.shape[0]
    pack = _pack_down_params_fm(W, b, Wp, bp)
    ws = 2 * (2 * kp * n * A_rows.dtype.itemsize
              + (kp * kp + (cin + cout + 2) * kp) * 4) + 4096
    return pl.pallas_call(
        _make_pooled_down_kernel(cin),
        out_shape=(jax.ShapeDtypeStruct((kp, kp), jnp.float32),
                   jax.ShapeDtypeStruct((1, kp), jnp.float32),
                   jax.ShapeDtypeStruct((cout, kp), jnp.float32),
                   jax.ShapeDtypeStruct((1, kp), jnp.float32)),
        in_specs=[_VMEM] * 4,
        out_specs=(_VMEM,) * 4,
        compiler_params=_mosaic_params(ws),
    )(A_rows, A_cols, x_fm, pack)


def pooled_gcn(A_rows, A_cols, x_fm, W, b):
    """Monolithic bottom level: A_pooled = A_rows @ A_cols, then GCN."""
    kp, n = A_rows.shape
    cin = x_fm.shape[0]
    cout = W.shape[0]
    pack = _pack_gcn_params_fm(W, b)
    ws = 2 * (2 * kp * n * A_rows.dtype.itemsize
              + (kp * kp + (cin + cout) * kp) * 4) + 4096
    return pl.pallas_call(
        _make_pooled_bottom_kernel(cin),
        out_shape=jax.ShapeDtypeStruct((cout, kp), jnp.float32),
        in_specs=[_VMEM] * 4,
        out_specs=_VMEM,
        compiler_params=_mosaic_params(ws),
    )(A_rows, A_cols, x_fm, pack)


# -----------------------------------------------------------------------------
# gPool selection / gUnpool scatter (tiny data-dependent index plumbing)
# -----------------------------------------------------------------------------
# TODO(synk): top_k / sort / dynamic gather-scatter stay in plain JAX glue; for
#             large graphs the row gathers should move in-kernel via scalar
#             prefetch (PrefetchScalarGridSpec + pl.Element row index_map).
def _gpool_select_fm(scores, h_fm, k):
    _, idx = jax.lax.top_k(scores, k)
    idx = jnp.sort(idx)                     # torch .unique() of distinct top-k idx
    y = jax.nn.sigmoid(scores[idx])         # sigmoid(proj)[idx] == sigmoid(proj[idx])
    return h_fm[:, idx] * y[None, :], idx


def _gunpool_fm(n, x_fm, idx):
    return jnp.zeros((x_fm.shape[0], n), x_fm.dtype).at[:, idx].set(x_fm)


# -----------------------------------------------------------------------------
# GraphUnet forward
# -----------------------------------------------------------------------------
@functools.partial(jax.jit, static_argnames=("ks",))
def graph_unet_forward(params, g, h, ks):
    N = g.shape[0]
    k1, k2 = ks

    tm_n, n_p = _tile_and_pad(N)
    tm_1, k1_p = _tile_and_pad(k1)
    _, k2_p = _tile_and_pad(k2)

    g_p = _pad2(g, n_p, n_p)
    # Hoisted degree scale for g (one tiny reduce, shared by down-1 and up-2).
    s_g = jax.lax.rsqrt(jnp.sum(g_p, axis=1, dtype=jnp.float32) + 2.0)[None, :]

    # ---- down 1 : row-tiled fused GCN + gPool projection --------------------
    h_fm = _pad2(h.astype(jnp.float32).T, h.shape[1], n_p)
    h1_fm, sc1 = gcn_pool_tiled(g_p, s_g, s_g * h_fm,
                                params["dg1_w"], params["dg1_b"],
                                params["p1_w"], params["p1_b"], tm_n)
    x1_fm, idx1 = _gpool_select_fm(sc1[0, :N], h1_fm[:, :N], k1)

    # Pooled adjacency glue: (A@A)[idx][:, idx] == A[idx, :] @ A[:, idx].
    a0_rows = _pad2(g_p[idx1, :], k1_p, n_p)
    a0_cols = _pad2(g_p[:, idx1], n_p, k1_p)
    x1_fm_p = _pad2(x1_fm, x1_fm.shape[0], k1_p)

    # ---- down 2 : pooled-adjacency matmul + GCN + projection (one kernel) ---
    g1_p, s_g1, h2_fm, sc2 = pooled_gcn_pool(
        a0_rows, a0_cols, x1_fm_p,
        params["dg2_w"], params["dg2_b"], params["p2_w"], params["p2_b"])
    x2_fm, idx2 = _gpool_select_fm(sc2[0, :k1], h2_fm[:, :k1], k2)

    a1_rows = _pad2(g1_p[idx2, :], k2_p, k1_p)
    a1_cols = _pad2(g1_p[:, idx2], k1_p, k2_p)
    x2_fm_p = _pad2(x2_fm, x2_fm.shape[0], k2_p)

    # ---- bottom : pooled-adjacency matmul + GCN -----------------------------
    hb_fm = pooled_gcn(a1_rows, a1_cols, x2_fm_p,
                       params["bot_w"], params["bot_b"])

    # ---- up 1 : unpool + GCN with fused skip residual (re-uses s(g1)) -------
    h_un1 = _gunpool_fm(k1_p, hb_fm[:, :k2], idx2)
    hu1_fm = gcn_res_tiled(g1_p, s_g1, s_g1 * h_un1, h2_fm,
                           params["ug1_w"], params["ug1_b"], tm_1)

    # ---- up 2 : unpool + GCN with fused skip residual (re-uses s(g)) --------
    h_un0 = _gunpool_fm(n_p, hu1_fm[:, :k1], idx1)
    out_fm = gcn_res_tiled(g_p, s_g, s_g * h_un0, h1_fm,
                           params["ug2_w"], params["ug2_b"], tm_n)

    return out_fm[:, :N].T, g


# -----------------------------------------------------------------------------
# Deterministic parameter init (shapes match the PyTorch __init__)
# -----------------------------------------------------------------------------
def init_params(key, in_dim, out_dim):
    keys = jax.random.split(key, 20)

    def xavier(k, shape):  # nn.init.xavier_uniform_ on (out, in)
        fan_out, fan_in = shape
        lim = (6.0 / (fan_in + fan_out)) ** 0.5
        return jax.random.uniform(k, shape, jnp.float32, -lim, lim)

    def lin_bias(k, fan_in, n):  # default nn.Linear bias init
        lim = 1.0 / (fan_in ** 0.5)
        return jax.random.uniform(k, (n,), jnp.float32, -lim, lim)

    def lin_weight(k, shape):    # default nn.Linear weight init (gPool proj)
        fan_in = shape[1]
        lim = 1.0 / (fan_in ** 0.5)
        return jax.random.uniform(k, shape, jnp.float32, -lim, lim)

    return {
        "dg1_w": xavier(keys[0], (3, in_dim)), "dg1_b": lin_bias(keys[1], in_dim, 3),
        "p1_w": lin_weight(keys[2], (1, 3)),   "p1_b": lin_bias(keys[3], 3, 1),
        "dg2_w": xavier(keys[4], (3, 3)),      "dg2_b": lin_bias(keys[5], 3, 3),
        "p2_w": lin_weight(keys[6], (1, 3)),   "p2_b": lin_bias(keys[7], 3, 1),
        "bot_w": xavier(keys[8], (3, 3)),      "bot_b": lin_bias(keys[9], 3, 3),
        "ug1_w": xavier(keys[10], (3, 3)),     "ug1_b": lin_bias(keys[11], 3, 3),
        "ug2_w": xavier(keys[12], (out_dim, out_dim)),
        "ug2_b": lin_bias(keys[13], out_dim, out_dim),
    }


# -----------------------------------------------------------------------------
# Pure-JAX reference (mirrors the PyTorch module, matmuls at highest precision)
# -----------------------------------------------------------------------------
def _gcn_ref(X, A, W, b):
    n = A.shape[0]
    A2 = A + 2.0 * jnp.eye(n, dtype=A.dtype)
    dis = 1.0 / jnp.sqrt(jnp.sum(A2, axis=1))
    An = A2 * dis[:, None] * dis[None, :]
    ax = jnp.dot(An, X, precision="highest")
    return jax.nn.relu(jnp.dot(ax, W.T, precision="highest") + b)


def _graph_unet_ref(params, g, h, ks):
    k1, k2 = ks
    h1 = _gcn_ref(h, g, params["dg1_w"], params["dg1_b"])
    p1 = jnp.dot(h1, params["p1_w"].T, precision="highest") + params["p1_b"]
    _, idx1 = jax.lax.top_k(p1[:, 0], k1)
    idx1 = jnp.sort(idx1)
    g1 = jnp.dot(g, g, precision="highest")[idx1][:, idx1]
    x1 = h1[idx1] * jax.nn.sigmoid(p1)[idx1]
    h2 = _gcn_ref(x1, g1, params["dg2_w"], params["dg2_b"])
    p2 = jnp.dot(h2, params["p2_w"].T, precision="highest") + params["p2_b"]
    _, idx2 = jax.lax.top_k(p2[:, 0], k2)
    idx2 = jnp.sort(idx2)
    g2 = jnp.dot(g1, g1, precision="highest")[idx2][:, idx2]
    x2 = h2[idx2] * jax.nn.sigmoid(p2)[idx2]
    hb = _gcn_ref(x2, g2, params["bot_w"], params["bot_b"])
    hu = jnp.zeros((k1, hb.shape[1]), hb.dtype).at[idx2].set(hb)
    hu = _gcn_ref(hu, g1, params["ug1_w"], params["ug1_b"]) + h2
    ho = jnp.zeros((g.shape[0], hu.shape[1]), hu.dtype).at[idx1].set(hu)
    ho = _gcn_ref(ho, g, params["ug2_w"], params["ug2_b"]) + h1
    return ho, g


if __name__ == "__main__":
    dim, in_dim, out_dim = 7, 2, 3
    ks = (5, 3)

    key = jax.random.PRNGKey(0)
    k_g, k_h, k_p = jax.random.split(key, 3)
    g = jnp.abs(jax.random.uniform(k_g, (dim, dim), jnp.float32))
    h = jax.random.uniform(k_h, (dim, in_dim), jnp.float32)

    params = init_params(k_p, in_dim, out_dim)

    out_h, out_g = graph_unet_forward(params, g, h, ks)
    jax.block_until_ready((out_h, out_g))

    assert out_h.shape == (dim, out_dim) and out_g.shape == (dim, dim)
    assert bool(jnp.all(jnp.isfinite(out_h)))

    ref_h, _ = _graph_unet_ref(params, g, h, ks)
    assert bool(jnp.allclose(out_h, ref_h, rtol=2e-2, atol=2e-2)), \
        "Pallas GraphUnet output diverges from the JAX reference"

    print("KERNEL_OK")
</pallas_src>

<mosaic_0001>
module attributes {stable_mosaic.version = 11 : i64} {
  func.func @kernel(%arg0: i32, %arg1: memref<8x8xf32, #tpu.memory_space<vmem>>, %arg2: memref<1x8xf32, #tpu.memory_space<vmem>>, %arg3: memref<2x8xf32, #tpu.memory_space<vmem>>, %arg4: memref<2x8xf32, #tpu.memory_space<vmem>>, %arg5: memref<3x5xf32, #tpu.memory_space<vmem>>, %arg6: memref<3x8xf32, #tpu.memory_space<vmem>>, %arg7: memref<1x8xf32, #tpu.memory_space<vmem>>) attributes {dimension_semantics = [#tpu.dimension_semantics<parallel>], iteration_bounds = array<i64: 1>, scalar_prefetch = 0 : i64, scratch_operands = 0 : i64, tpu.core_type = #tpu.core_type<tc>, window_params = [{transform_indices = @transform_0, window_bounds = array<i64: 8, 8>}, {transform_indices = @transform_1, window_bounds = array<i64: 1, 8>}, {pipeline_mode = #tpu.pipeline_mode<synchronous>, transform_indices = @transform_2, window_bounds = array<i64: 2, 8>}, {transform_indices = @transform_3, window_bounds = array<i64: 2, 8>}, {pipeline_mode = #tpu.pipeline_mode<synchronous>, transform_indices = @transform_4, window_bounds = array<i64: 3, 5>}, {transform_indices = @transform_5, window_bounds = array<i64: 3, 8>}, {transform_indices = @transform_6, window_bounds = array<i64: 1, 8>}]} {
    %c0 = arith.constant 0 : index
    %c0_0 = arith.constant 0 : index
    %0 = vector.load %arg5[%c0, %c0_0] : memref<3x5xf32, #tpu.memory_space<vmem>>, vector<3x2xf32>
    %c0_1 = arith.constant 0 : index
    %c2 = arith.constant 2 : index
    %1 = vector.load %arg5[%c0_1, %c2] : memref<3x5xf32, #tpu.memory_space<vmem>>, vector<3x1xf32>
    %c0_2 = arith.constant 0 : index
    %c3 = arith.constant 3 : index
    %2 = vector.load %arg5[%c0_2, %c3] : memref<3x5xf32, #tpu.memory_space<vmem>>, vector<3x1xf32>
    %c0_3 = arith.constant 0 : index
    %c4 = arith.constant 4 : index
    %3 = vector.load %arg5[%c0_3, %c4] : memref<3x5xf32, #tpu.memory_space<vmem>>, vector<1x1xf32>
    %c0_4 = arith.constant 0 : index
    %c0_5 = arith.constant 0 : index
    %4 = vector.load %arg1[%c0_4, %c0_5] : memref<8x8xf32, #tpu.memory_space<vmem>>, vector<8x8xf32>
    %c0_6 = arith.constant 0 : index
    %c0_7 = arith.constant 0 : index
    %5 = vector.load %arg2[%c0_6, %c0_7] : memref<1x8xf32, #tpu.memory_space<vmem>>, vector<1x8xf32>
    %c0_8 = arith.constant 0 : index
    %c0_9 = arith.constant 0 : index
    %6 = vector.load %arg3[%c0_8, %c0_9] : memref<2x8xf32, #tpu.memory_space<vmem>>, vector<2x8xf32>
    %c0_10 = arith.constant 0 : index
    %c0_11 = arith.constant 0 : index
    %7 = vector.load %arg4[%c0_10, %c0_11] : memref<2x8xf32, #tpu.memory_space<vmem>>, vector<2x8xf32>
    %cst = arith.constant dense<0.000000e+00> : vector<2x8xf32>
    %8 = tpu.matmul %6, %4, %cst {dimension_numbers = #tpu.dot_dimension_numbers<[1], [1], [0], [0], [0, 0, 1, 0], [], []>} : vector<2x8xf32>, vector<8x8xf32>, vector<2x8xf32> -> vector<2x8xf32>
    %cst_12 = arith.constant 2.000000e+00 : f32
    %9 = vector.broadcast %cst_12 : f32 to vector<2x8xf32>
    %10 = arith.mulf %9, %7 : vector<2x8xf32>
    %11 = arith.addf %8, %10 : vector<2x8xf32>
    %12 = vector.broadcast %5 : vector<1x8xf32> to vector<2x8xf32>
    %13 = arith.mulf %12, %11 : vector<2x8xf32>
    %cst_13 = arith.constant dense<0.000000e+00> : vector<3x8xf32>
    %14 = tpu.matmul %0, %13, %cst_13 {dimension_numbers = #tpu.dot_dimension_numbers<[1], [0], [0], [1], [0, 0, 1, 1], [], []>} : vector<3x2xf32>, vector<2x8xf32>, vector<3x8xf32> -> vector<3x8xf32>
    %15 = vector.broadcast %1 : vector<3x1xf32> to vector<3x8xf32>
    %16 = arith.addf %14, %15 : vector<3x8xf32>
    %cst_14 = arith.constant 0.000000e+00 : f32
    %17 = vector.broadcast %cst_14 : f32 to vector<3x8xf32>
    %18 = arith.maximumf %16, %17 : vector<3x8xf32>
    %c0_15 = arith.constant 0 : index
    %c0_16 = arith.constant 0 : index
    %19 = vector.load %arg6[%c0_15, %c0_16] : memref<3x8xf32, #tpu.memory_space<vmem>>, vector<3x8xf32>
    tpu.vector_store %arg6[%c0_15, %c0_16], %18 {strides = array<i32>} : memref<3x8xf32, #tpu.memory_space<vmem>>, vector<3x8xf32>,
    %20 = vector.broadcast %2 : vector<3x1xf32> to vector<3x8xf32>
    %21 = arith.mulf %20, %18 : vector<3x8xf32>
    %cst_17 = arith.constant dense<0.000000e+00> : vector<8xf32>
    %22 = vector.multi_reduction <add>, %21, %cst_17 [0] : vector<3x8xf32> to vector<8xf32>
    %23 = vector.shape_cast %22 : vector<8xf32> to vector<1x8xf32>
    %24 = vector.broadcast %3 : vector<1x1xf32> to vector<1x8xf32>
    %25 = arith.addf %23, %24 : vector<1x8xf32>
    %c0_18 = arith.constant 0 : index
    %c0_19 = arith.constant 0 : index
    %26 = vector.load %arg7[%c0_18, %c0_19] : memref<1x8xf32, #tpu.memory_space<vmem>>, vector<1x8xf32>
    tpu.vector_store %arg7[%c0_18, %c0_19], %25 {strides = array<i32>} : memref<1x8xf32, #tpu.memory_space<vmem>>, vector<1x8xf32>,
    return
  }
  func.func @transform_0(%arg0: i32) -> (i32, i32) {
    %c0_i32 = arith.constant 0 : i32
    %c0_i32_0 = arith.constant 0 : i32
    return %arg0, %c0_i32 : i32, i32
  }
  func.func @transform_1(%arg0: i32) -> (i32, i32) {
    %c0_i32 = arith.constant 0 : i32
    %c0_i32_0 = arith.constant 0 : i32
    return %c0_i32, %arg0 : i32, i32
  }
  func.func @transform_2(%arg0: i32) -> (i32, i32) {
    %c0_i32 = arith.constant 0 : i32
    %c0_i32_0 = arith.constant 0 : i32
    %c0_i32_1 = arith.constant 0 : i32
    return %c0_i32, %c0_i32_0 : i32, i32
  }
  func.func @transform_3(%arg0: i32) -> (i32, i32) {
    %c0_i32 = arith.constant 0 : i32
    %c0_i32_0 = arith.constant 0 : i32
    return %c0_i32, %arg0 : i32, i32
  }
  func.func @transform_4(%arg0: i32) -> (i32, i32) {
    %c0_i32 = arith.constant 0 : i32
    %c0_i32_0 = arith.constant 0 : i32
    %c0_i32_1 = arith.constant 0 : i32
    return %c0_i32, %c0_i32_0 : i32, i32
  }
  func.func @transform_5(%arg0: i32) -> (i32, i32) {
    %c0_i32 = arith.constant 0 : i32
    %c0_i32_0 = arith.constant 0 : i32
    return %c0_i32, %arg0 : i32, i32
  }
  func.func @transform_6(%arg0: i32) -> (i32, i32) {
    %c0_i32 = arith.constant 0 : i32
    %c0_i32_0 = arith.constant 0 : i32
    return %c0_i32, %arg0 : i32, i32
  }
}

module attributes {stable_mosaic.version = 11 : i64} {
  func.func @kernel(%arg0: memref<8x8xf32, #tpu.memory_space<vmem>>, %arg1: memref<8x8xf32, #tpu.memory_space<vmem>>, %arg2: memref<3x8xf32, #tpu.memory_space<vmem>>, %arg3: memref<3x6xf32, #tpu.memory_space<vmem>>, %arg4: memref<8x8xf32, #tpu.memory_space<vmem>>, %arg5: memref<1x8xf32, #tpu.memory_space<vmem>>, %arg6: memref<3x8xf32, #tpu.memory_space<vmem>>, %arg7: memref<1x8xf32, #tpu.memory_space<vmem>>) attributes {dimension_semantics = [], scalar_prefetch = 0 : i64, scratch_operands = 0 : i64, tpu.core_type = #tpu.core_type<tc>} {
    %c0 = arith.constant 0 : index
    %c0_0 = arith.constant 0 : index
    %0 = vector.load %arg3[%c0, %c0_0] : memref<3x6xf32, #tpu.memory_space<vmem>>, vector<3x3xf32>
    %c0_1 = arith.constant 0 : index
    %c3 = arith.constant 3 : index
    %1 = vector.load %arg3[%c0_1, %c3] : memref<3x6xf32, #tpu.memory_space<vmem>>, vector<3x1xf32>
    %c0_2 = arith.constant 0 : index
    %c4 = arith.constant 4 : index
    %2 = vector.load %arg3[%c0_2, %c4] : memref<3x6xf32, #tpu.memory_space<vmem>>, vector<3x1xf32>
    %c0_3 = arith.constant 0 : index
    %c5 = arith.constant 5 : index
    %3 = vector.load %arg3[%c0_3, %c5] : memref<3x6xf32, #tpu.memory_space<vmem>>, vector<1x1xf32>
    %c0_4 = arith.constant 0 : index
    %c0_5 = arith.constant 0 : index
    %4 = vector.load %arg0[%c0_4, %c0_5] : memref<8x8xf32, #tpu.memory_space<vmem>>, vector<8x8xf32>
    %c0_6 = arith.constant 0 : index
    %c0_7 = arith.constant 0 : index
    %5 = vector.load %arg1[%c0_6, %c0_7] : memref<8x8xf32, #tpu.memory_space<vmem>>, vector<8x8xf32>
    %c0_8 = arith.constant 0 : index
    %c0_9 = arith.constant 0 : index
    %6 = vector.load %arg2[%c0_8, %c0_9] : memref<3x8xf32, #tpu.memory_space<vmem>>, vector<3x8xf32>
    %cst = arith.constant dense<0.000000e+00> : vector<8x8xf32>
    %7 = tpu.matmul %4, %5, %cst {dimension_numbers = #tpu.dot_dimension_numbers<[1], [0], [0], [1], [0, 0, 1, 1], [], []>} : vector<8x8xf32>, vector<8x8xf32>, vector<8x8xf32> -> vector<8x8xf32>
    %cst_10 = arith.constant 1.000000e+00 : f32
    %8 = vector.broadcast %cst_10 : f32 to vector<1x8xf32>
    %cst_11 = arith.constant dense<0.000000e+00> : vector<1x8xf32>
    %9 = tpu.matmul %8, %7, %cst_11 {dimension_numbers = #tpu.dot_dimension_numbers<[1], [1], [0], [0], [0, 0, 1, 0], [], []>} : vector<1x8xf32>, vector<8x8xf32>, vector<1x8xf32> -> vector<1x8xf32>
    %cst_12 = arith.constant 2.000000e+00 : f32
    %10 = vector.broadcast %cst_12 : f32 to vector<1x8xf32>
    %11 = arith.addf %9, %10 : vector<1x8xf32>
    %12 = math.rsqrt %11 : vector<1x8xf32>
    %13 = vector.broadcast %12 : vector<1x8xf32> to vector<3x8xf32>
    %14 = arith.mulf %6, %13 : vector<3x8xf32>
    %cst_13 = arith.constant dense<0.000000e+00> : vector<3x8xf32>
    %15 = tpu.matmul %14, %7, %cst_13 {dimension_numbers = #tpu.dot_dimension_numbers<[1], [1], [0], [0], [0, 0, 1, 0], [], []>} : vector<3x8xf32>, vector<8x8xf32>, vector<3x8xf32> -> vector<3x8xf32>
    %cst_14 = arith.constant 2.000000e+00 : f32
    %16 = vector.broadcast %cst_14 : f32 to vector<3x8xf32>
    %17 = arith.mulf %16, %14 : vector<3x8xf32>
    %18 = arith.addf %15, %17 : vector<3x8xf32>
    %19 = vector.broadcast %12 : vector<1x8xf32> to vector<3x8xf32>
    %20 = arith.mulf %19, %18 : vector<3x8xf32>
    %cst_15 = arith.constant dense<0.000000e+00> : vector<3x8xf32>
    %21 = tpu.matmul %0, %20, %cst_15 {dimension_numbers = #tpu.dot_dimension_numbers<[1], [0], [0], [1], [0, 0, 1, 1], [], []>} : vector<3x3xf32>, vector<3x8xf32>, vector<3x8xf32> -> vector<3x8xf32>
    %22 = vector.broadcast %1 : vector<3x1xf32> to vector<3x8xf32>
    %23 = arith.addf %21, %22 : vector<3x8xf32>
    %cst_16 = arith.constant 0.000000e+00 : f32
    %24 = vector.broadcast %cst_16 : f32 to vector<3x8xf32>
    %25 = arith.maximumf %23, %24 : vector<3x8xf32>
    %c0_17 = arith.constant 0 : index
    %c0_18 = arith.constant 0 : index
    %26 = vector.load %arg4[%c0_17, %c0_18] : memref<8x8xf32, #tpu.memory_space<vmem>>, vector<8x8xf32>
    tpu.vector_store %arg4[%c0_17, %c0_18], %7 {strides = array<i32>} : memref<8x8xf32, #tpu.memory_space<vmem>>, vector<8x8xf32>,
    %c0_19 = arith.constant 0 : index
    %c0_20 = arith.constant 0 : index
    %27 = vector.load %arg5[%c0_19, %c0_20] : memref<1x8xf32, #tpu.memory_space<vmem>>, vector<1x8xf32>
    tpu.vector_store %arg5[%c0_19, %c0_20], %12 {strides = array<i32>} : memref<1x8xf32, #tpu.memory_space<vmem>>, vector<1x8xf32>,
    %c0_21 = arith.constant 0 : index
    %c0_22 = arith.constant 0 : index
    %28 = vector.load %arg6[%c0_21, %c0_22] : memref<3x8xf32, #tpu.memory_space<vmem>>, vector<3x8xf32>
    tpu.vector_store %arg6[%c0_21, %c0_22], %25 {strides = array<i32>} : memref<3x8xf32, #tpu.memory_space<vmem>>, vector<3x8xf32>,
    %29 = vector.broadcast %2 : vector<3x1xf32> to vector<3x8xf32>
    %30 = arith.mulf %29, %25 : vector<3x8xf32>
    %cst_23 = arith.constant dense<0.000000e+00> : vector<8xf32>
    %31 = vector.multi_reduction <add>, %30, %cst_23 [0] : vector<3x8xf32> to vector<8xf32>
    %32 = vector.shape_cast %31 : vector<8xf32> to vector<1x8xf32>
    %33 = vector.broadcast %3 : vector<1x1xf32> to vector<1x8xf32>
    %34 = arith.addf %32, %33 : vector<1x8xf32>
    %c0_24 = arith.constant 0 : index
    %c0_25 = arith.constant 0 : index
    %35 = vector.load %arg7[%c0_24, %c0_25] : memref<1x8xf32, #tpu.memory_space<vmem>>, vector<1x8xf32>
    tpu.vector_store %arg7[%c0_24, %c0_25], %34 {strides = array<i32>} : memref<1x8xf32, #tpu.memory_space<vmem>>, vector<1x8xf32>,
    return
  }
}

module attributes {stable_mosaic.version = 11 : i64} {
  func.func @kernel(%arg0: memref<8x8xf32, #tpu.memory_space<vmem>>, %arg1: memref<8x8xf32, #tpu.memory_space<vmem>>, %arg2: memref<3x8xf32, #tpu.memory_space<vmem>>, %arg3: memref<3x4xf32, #tpu.memory_space<vmem>>, %arg4: memref<3x8xf32, #tpu.memory_space<vmem>>) attributes {dimension_semantics = [], scalar_prefetch = 0 : i64, scratch_operands = 0 : i64, tpu.core_type = #tpu.core_type<tc>} {
    %c0 = arith.constant 0 : index
    %c0_0 = arith.constant 0 : index
    %0 = vector.load %arg3[%c0, %c0_0] : memref<3x4xf32, #tpu.memory_space<vmem>>, vector<3x3xf32>
    %c0_1 = arith.constant 0 : index
    %c3 = arith.constant 3 : index
    %1 = vector.load %arg3[%c0_1, %c3] : memref<3x4xf32, #tpu.memory_space<vmem>>, vector<3x1xf32>
    %c0_2 = arith.constant 0 : index
    %c0_3 = arith.constant 0 : index
    %2 = vector.load %arg0[%c0_2, %c0_3] : memref<8x8xf32, #tpu.memory_space<vmem>>, vector<8x8xf32>
    %c0_4 = arith.constant 0 : index
    %c0_5 = arith.constant 0 : index
    %3 = vector.load %arg1[%c0_4, %c0_5] : memref<8x8xf32, #tpu.memory_space<vmem>>, vector<8x8xf32>
    %c0_6 = arith.constant 0 : index
    %c0_7 = arith.constant 0 : index
    %4 = vector.load %arg2[%c0_6, %c0_7] : memref<3x8xf32, #tpu.memory_space<vmem>>, vector<3x8xf32>
    %cst = arith.constant dense<0.000000e+00> : vector<8x8xf32>
    %5 = tpu.matmul %2, %3, %cst {dimension_numbers = #tpu.dot_dimension_numbers<[1], [0], [0], [1], [0, 0, 1, 1], [], []>} : vector<8x8xf32>, vector<8x8xf32>, vector<8x8xf32> -> vector<8x8xf32>
    %cst_8 = arith.constant 1.000000e+00 : f32
    %6 = vector.broadcast %cst_8 : f32 to vector<1x8xf32>
    %cst_9 = arith.constant dense<0.000000e+00> : vector<1x8xf32>
    %7 = tpu.matmul %6, %5, %cst_9 {dimension_numbers = #tpu.dot_dimension_numbers<[1], [1], [0], [0], [0, 0, 1, 0], [], []>} : vector<1x8xf32>, vector<8x8xf32>, vector<1x8xf32> -> vector<1x8xf32>
    %cst_10 = arith.constant 2.000000e+00 : f32
    %8 = vector.broadcast %cst_10 : f32 to vector<1x8xf32>
    %9 = arith.addf %7, %8 : vector<1x8xf32>
    %10 = math.rsqrt %9 : vector<1x8xf32>
    %11 = vector.broadcast %10 : vector<1x8xf32> to vector<3x8xf32>
    %12 = arith.mulf %4, %11 : vector<3x8xf32>
    %cst_11 = arith.constant dense<0.000000e+00> : vector<3x8xf32>
    %13 = tpu.matmul %12, %5, %cst_11 {dimension_numbers = #tpu.dot_dimension_numbers<[1], [1], [0], [0], [0, 0, 1, 0], [], []>} : vector<3x8xf32>, vector<8x8xf32>, vector<3x8xf32> -> vector<3x8xf32>
    %cst_12 = arith.constant 2.000000e+00 : f32
    %14 = vector.broadcast %cst_12 : f32 to vector<3x8xf32>
    %15 = arith.mulf %14, %12 : vector<3x8xf32>
    %16 = arith.addf %13, %15 : vector<3x8xf32>
    %17 = vector.broadcast %10 : vector<1x8xf32> to vector<3x8xf32>
    %18 = arith.mulf %17, %16 : vector<3x8xf32>
    %cst_13 = arith.constant dense<0.000000e+00> : vector<3x8xf32>
    %19 = tpu.matmul %0, %18, %cst_13 {dimension_numbers = #tpu.dot_dimension_numbers<[1], [0], [0], [1], [0, 0, 1, 1], [], []>} : vector<3x3xf32>, vector<3x8xf32>, vector<3x8xf32> -> vector<3x8xf32>
    %20 = vector.broadcast %1 : vector<3x1xf32> to vector<3x8xf32>
    %21 = arith.addf %19, %20 : vector<3x8xf32>
    %cst_14 = arith.constant 0.000000e+00 : f32
    %22 = vector.broadcast %cst_14 : f32 to vector<3x8xf32>
    %23 = arith.maximumf %21, %22 : vector<3x8xf32>
    %c0_15 = arith.constant 0 : index
    %c0_16 = arith.constant 0 : index
    %24 = vector.load %arg4[%c0_15, %c0_16] : memref<3x8xf32, #tpu.memory_space<vmem>>, vector<3x8xf32>
    tpu.vector_store %arg4[%c0_15, %c0_16], %23 {strides = array<i32>} : memref<3x8xf32, #tpu.memory_space<vmem>>, vector<3x8xf32>,
    return
  }
}

module attributes {stable_mosaic.version = 11 : i64} {
  func.func @kernel(%arg0: i32, %arg1: memref<8x8xf32, #tpu.memory_space<vmem>>, %arg2: memref<1x8xf32, #tpu.memory_space<vmem>>, %arg3: memref<3x8xf32, #tpu.memory_space<vmem>>, %arg4: memref<3x8xf32, #tpu.memory_space<vmem>>, %arg5: memref<3x8xf32, #tpu.memory_space<vmem>>, %arg6: memref<3x4xf32, #tpu.memory_space<vmem>>, %arg7: memref<3x8xf32, #tpu.memory_space<vmem>>) attributes {dimension_semantics = [#tpu.dimension_semantics<parallel>], iteration_bounds = array<i64: 1>, scalar_prefetch = 0 : i64, scratch_operands = 0 : i64, tpu.core_type = #tpu.core_type<tc>, window_params = [{transform_indices = @transform_0, window_bounds = array<i64: 8, 8>}, {transform_indices = @transform_1, window_bounds = array<i64: 1, 8>}, {pipeline_mode = #tpu.pipeline_mode<synchronous>, transform_indices = @transform_2, window_bounds = array<i64: 3, 8>}, {transform_indices = @transform_3, window_bounds = array<i64: 3, 8>}, {transform_indices = @transform_4, window_bounds = array<i64: 3, 8>}, {pipeline_mode = #tpu.pipeline_mode<synchronous>, transform_indices = @transform_5, window_bounds = array<i64: 3, 4>}, {transform_indices = @transform_6, window_bounds = array<i64: 3, 8>}]} {
    %c0 = arith.constant 0 : index
    %c0_0 = arith.constant 0 : index
    %0 = vector.load %arg6[%c0, %c0_0] : memref<3x4xf32, #tpu.memory_space<vmem>>, vector<3x3xf32>
    %c0_1 = arith.constant 0 : index
    %c3 = arith.constant 3 : index
    %1 = vector.load %arg6[%c0_1, %c3] : memref<3x4xf32, #tpu.memory_space<vmem>>, vector<3x1xf32>
    %c0_2 = arith.constant 0 : index
    %c0_3 = arith.constant 0 : index
    %2 = vector.load %arg1[%c0_2, %c0_3] : memref<8x8xf32, #tpu.memory_space<vmem>>, vector<8x8xf32>
    %c0_4 = arith.constant 0 : index
    %c0_5 = arith.constant 0 : index
    %3 = vector.load %arg2[%c0_4, %c0_5] : memref<1x8xf32, #tpu.memory_space<vmem>>, vector<1x8xf32>
    %c0_6 = arith.constant 0 : index
    %c0_7 = arith.constant 0 : index
    %4 = vector.load %arg3[%c0_6, %c0_7] : memref<3x8xf32, #tpu.memory_space<vmem>>, vector<3x8xf32>
    %c0_8 = arith.constant 0 : index
    %c0_9 = arith.constant 0 : index
    %5 = vector.load %arg4[%c0_8, %c0_9] : memref<3x8xf32, #tpu.memory_space<vmem>>, vector<3x8xf32>
    %cst = arith.constant dense<0.000000e+00> : vector<3x8xf32>
    %6 = tpu.matmul %4, %2, %cst {dimension_numbers = #tpu.dot_dimension_numbers<[1], [1], [0], [0], [0, 0, 1, 0], [], []>} : vector<3x8xf32>, vector<8x8xf32>, vector<3x8xf32> -> vector<3x8xf32>
    %cst_10 = arith.constant 2.000000e+00 : f32
    %7 = vector.broadcast %cst_10 : f32 to vector<3x8xf32>
    %8 = arith.mulf %7, %5 : vector<3x8xf32>
    %9 = arith.addf %6, %8 : vector<3x8xf32>
    %10 = vector.broadcast %3 : vector<1x8xf32> to vector<3x8xf32>
    %11 = arith.mulf %10, %9 : vector<3x8xf32>
    %cst_11 = arith.constant dense<0.000000e+00> : vector<3x8xf32>
    %12 = tpu.matmul %0, %11, %cst_11 {dimension_numbers = #tpu.dot_dimension_numbers<[1], [0], [0], [1], [0, 0, 1, 1], [], []>} : vector<3x3xf32>, vector<3x8xf32>, vector<3x8xf32> -> vector<3x8xf32>
    %13 = vector.broadcast %1 : vector<3x1xf32> to vector<3x8xf32>
    %14 = arith.addf %12, %13 : vector<3x8xf32>
    %cst_12 = arith.constant 0.000000e+00 : f32
    %15 = vector.broadcast %cst_12 : f32 to vector<3x8xf32>
    %16 = arith.maximumf %14, %15 : vector<3x8xf32>
    %c0_13 = arith.constant 0 : index
    %c0_14 = arith.constant 0 : index
    %17 = vector.load %arg5[%c0_13, %c0_14] : memref<3x8xf32, #tpu.memory_space<vmem>>, vector<3x8xf32>
    %18 = arith.addf %16, %17 : vector<3x8xf32>
    %c0_15 = arith.constant 0 : index
    %c0_16 = arith.constant 0 : index
    %19 = vector.load %arg7[%c0_15, %c0_16] : memref<3x8xf32, #tpu.memory_space<vmem>>, vector<3x8xf32>
    tpu.vector_store %arg7[%c0_15, %c0_16], %18 {strides = array<i32>} : memref<3x8xf32, #tpu.memory_space<vmem>>, vector<3x8xf32>,
    return
  }
  func.func @transform_0(%arg0: i32) -> (i32, i32) {
    %c0_i32 = arith.constant 0 : i32
    %c0_i32_0 = arith.constant 0 : i32
    return %arg0, %c0_i32 : i32, i32
  }
  func.func @transform_1(%arg0: i32) -> (i32, i32) {
    %c0_i32 = arith.constant 0 : i32
    %c0_i32_0 = arith.constant 0 : i32
    return %c0_i32, %arg0 : i32, i32
  }
  func.func @transform_2(%arg0: i32) -> (i32, i32) {
    %c0_i32 = arith.constant 0 : i32
    %c0_i32_0 = arith.constant 0 : i32
    %c0_i32_1 = arith.constant 0 : i32
    return %c0_i32, %c0_i32_0 : i32, i32
  }
  func.func @transform_3(%arg0: i32) -> (i32, i32) {
    %c0_i32 = arith.constant 0 : i32
    %c0_i32_0 = arith.constant 0 : i32
    return %c0_i32, %arg0 : i32, i32
  }
  func.func @transform_4(%arg0: i32) -> (i32, i32) {
    %c0_i32 = arith.constant 0 : i32
    %c0_i32_0 = arith.constant 0 : i32
    return %c0_i32, %arg0 : i32, i32
  }
  func.func @transform_5(%arg0: i32) -> (i32, i32) {
    %c0_i32 = arith.constant 0 : i32
    %c0_i32_0 = arith.constant 0 : i32
    %c0_i32_1 = arith.constant 0 : i32
    return %c0_i32, %c0_i32_0 : i32, i32
  }
  func.func @transform_6(%arg0: i32) -> (i32, i32) {
    %c0_i32 = arith.constant 0 : i32
    %c0_i32_0 = arith.constant 0 : i32
    return %c0_i32, %arg0 : i32, i32
  }
}

</mosaic_0001>

<llo_original>
// kernel: graph_unet_forward.5
$region0: #{graph_unet_forward.5}
  #allocation0 [shape = 'u32[]', space=smem, size = 0x4, offset = 0x4, fixed_abs, tag = 'smem constant byte address 0x4 - core index']
  #allocation1 [shape = 'u32[144,128]{1,0:T(1,128)}', space=vmem, size = 0x12000, scoped, tag = 'internal scratch']
  %s0 = inlined_call_operand.vmem [shape: f32[8,8], index: 0, kind: input, shape index: {}]
  %s1 = inlined_call_operand.vmem [shape: f32[1,8], index: 1, kind: input, shape index: {}]
  %s2 = inlined_call_operand.vmem [shape: f32[2,8], index: 2, kind: input, shape index: {}, may-alias: {2,3}]
  %s3 = inlined_call_operand.vmem [shape: f32[2,8], index: 3, kind: input, shape index: {}, may-alias: {2,3}]
  %s4 = inlined_call_operand.vmem [shape: f32[3,5], index: 4, kind: input, shape index: {}]
  %s5 = inlined_call_operand.vmem [shape: f32[3,8], index: 5, kind: output, shape index: {0}]
  %s6 = inlined_call_operand.vmem [shape: f32[1,8], index: 6, kind: output, shape index: {1}]
  %7 = xla_tuple %s5, %s6
  %s8 = sld [smem:[#allocation0]]
  $region38: #{graph_unet_forward.5} parent=0
    _
  %s10 = ssub.s32 1, %s8
  %s11 = scalar_select 0, %s10, %s8
  // Predicated region
  $region2: #{graph_unet_forward.5} parent=0 // pred_check
    _
  $region3: #{graph_unet_forward.5} parent=0 // pred_check_branch
    %13 = sbr.rel (0) target = $region5
  $region4: #{graph_unet_forward.5} parent=0 // pred_region
    _
  $region5: #{graph_unet_forward.5} parent=0 // pred_fallthru
    _
  // Predicated region
  $region6: #{graph_unet_forward.5} parent=0 // pred_check
    _
  $region7: #{graph_unet_forward.5} parent=0 // pred_check_branch
    %15 = sbr.rel (0) target = $region9
  $region8: #{graph_unet_forward.5} parent=0 // pred_region
    _
  $region9: #{graph_unet_forward.5} parent=0 // pred_fallthru
    _
  // Predicated region
  $region10: #{graph_unet_forward.5} parent=0 // pred_check
    _
  $region11: #{graph_unet_forward.5} parent=0 // pred_check_branch
    %17 = sbr.rel (0) target = $region13
  $region12: #{graph_unet_forward.5} parent=0 // pred_region
    _
  $region13: #{graph_unet_forward.5} parent=0 // pred_fallthru
    _
  // Predicated region
  $region14: #{graph_unet_forward.5} parent=0 // pred_check
    _
  $region15: #{graph_unet_forward.5} parent=0 // pred_check_branch
    %19 = sbr.rel (0) target = $region17
  $region16: #{graph_unet_forward.5} parent=0 // pred_region
    _
  $region17: #{graph_unet_forward.5} parent=0 // pred_fallthru
    _
  // Predicated region
  $region18: #{graph_unet_forward.5} parent=0 // pred_check
    _
  $region19: #{graph_unet_forward.5} parent=0 // pred_check_branch
    %21 = sbr.rel (0) target = $region21
  $region20: #{graph_unet_forward.5} parent=0 // pred_region
    _
  $region21: #{graph_unet_forward.5} parent=0 // pred_fallthru
    _
  %v22 = vld [vmem:[%s4] sm:$0x7]
  %v23 = vld [vmem:[%s4] sm:$0x1]
  %v24 = vld [vmem:[%s0] sm:$0xff]
  %v25 = vld [vmem:[%s1] sm:$0x1]
  %v26 = vld [vmem:[%s2] sm:$0x3]
  %v27 = vld [vmem:[%s3] sm:$0x3]
  %v28 = vmul.f32 %v27, 2.0
  %vm29 = vcmask 64512
  %v31 = vsel %vm29, %v26, 0
  %v34 = vsel %vm29, %v24, 0
  %36 = vmatprep.subr.mxu0 0.0
  %37 = vmatpush1.xpose.msra.mxu0 %v34
  %38 = vmatprep.subr.mxu0 0.0
  %39 = vmatpush1.xpose.msra.mxu0 0.0
  %40 = vmatprep.subr.mxu0 0.0
  %41 = vmatpush1.xpose.msra.mxu0 0.0
  %42 = vmatprep.subr.mxu0 0.0
  %43 = vmatpush1.xpose.msra.mxu0 0.0
  %44 = vmatprep.subr.mxu0 0.0
  %45 = vmatpush1.xpose.msra.mxu0 0.0
  %46 = vmatprep.subr.mxu0 0.0
  %47 = vmatpush1.xpose.msra.mxu0 0.0
  %48 = vmatprep.subr.mxu0 0.0
  %49 = vmatpush1.xpose.msra.mxu0 0.0
  %50 = vmatprep.subr.mxu0 0.0
  %51 = vmatpush1.xpose.msra.mxu0 0.0
  %52 = vmatprep.subr.mxu0 0.0
  %53 = vmatpush1.xpose.msra.mxu0 0.0
  %54 = vmatprep.subr.mxu0 0.0
  %55 = vmatpush1.xpose.msra.mxu0 0.0
  %56 = vmatprep.subr.mxu0 0.0
  %57 = vmatpush1.xpose.msra.mxu0 0.0
  %58 = vmatprep.subr.mxu0 0.0
  %59 = vmatpush1.xpose.msra.mxu0 0.0
  %60 = vmatprep.subr.mxu0 0.0
  %61 = vmatpush1.xpose.msra.mxu0 0.0
  %62 = vmatprep.subr.mxu0 0.0
  %63 = vmatpush1.xpose.msra.mxu0 0.0
  %64 = vmatprep.subr.mxu0 0.0
  %65 = vmatpush1.xpose.msra.mxu0 0.0
  %66 = vmatprep.subr.mxu0 0.0
  %67 = vmatpush1.xpose.msra.mxu0 0.0
  %68 = vmatprep.subr.mxu0 0.0
  %69 = vmatpush1.xpose.msra.mxu0 0.0
  %70 = vmatprep.subr.mxu0 0.0
  %71 = vmatpush1.xpose.msra.mxu0 0.0
  %72 = vmatprep.subr.mxu0 0.0
  %73 = vmatpush1.xpose.msra.mxu0 0.0
  %74 = vmatprep.subr.mxu0 0.0
  %75 = vmatpush1.xpose.msra.mxu0 0.0
  %76 = vmatprep.subr.mxu0 0.0
  %77 = vmatpush1.xpose.msra.mxu0 0.0
  %78 = vmatprep.subr.mxu0 0.0
  %79 = vmatpush1.xpose.msra.mxu0 0.0
  %80 = vmatprep.subr.mxu0 0.0
  %81 = vmatpush1.xpose.msra.mxu0 0.0
  %82 = vmatprep.subr.mxu0 0.0
  %83 = vmatpush1.xpose.msra.mxu0 0.0
  %84 = vmatprep.subr.mxu0 0.0
  %85 = vmatpush1.xpose.msra.mxu0 0.0
  %86 = vmatprep.subr.mxu0 0.0
  %87 = vmatpush1.xpose.msra.mxu0 0.0
  %88 = vmatprep.subr.mxu0 0.0
  %89 = vmatpush1.xpose.msra.mxu0 0.0
  %90 = vmatprep.subr.mxu0 0.0
  %91 = vmatpush1.xpose.msra.mxu0 0.0
  %92 = vmatprep.subr.mxu0 0.0
  %93 = vmatpush1.xpose.msra.mxu0 0.0
  %94 = vmatprep.subr.mxu0 0.0
  %95 = vmatpush1.xpose.msra.mxu0 0.0
  %96 = vmatprep.subr.mxu0 0.0
  %97 = vmatpush1.xpose.msra.mxu0 0.0
  %98 = vmatprep.subr.mxu0 0.0
  %99 = vmatpush1.xpose.msra.mxu0 0.0
  %100 = vmatprep.mubr.f32.mxu0 0.0
  %101 = vmatmul.mubr.f32.gmra.mrb[0].mxu0 %v31
  %v102 = vpop.f32.mrb[0].mxu0
  %v103 = vadd.f32 %v28, %v102
  %v104 = vpop.f32.mrb[0].mxu0
  %105 = vdwg.mxu0
  %v107 = vlaneseq
  %v108 = vshrl.u32 %v107, 7
  %v109 = vsub.s32 0, %v108
  %v110 = vrot.slane %v25, %v109
  %v112 = vmul.f32 %v110, %v103
  %114 = vset.pattern.permute.xlu0 2
  %115 = vperm.xlu0 %114, %v22
  %v116 = vpop.permute.xlu0 %115
  %vm118 = vcmask 15360
  %v119 = vsel %vm118, %v22, 0
  %vm121 = vcmask 1041408
  %v123 = vsel %vm121, %v112, 0
  %125 = vmatprep.subr.mxu0 0.0
  %126 = vmatpush1.msra.mxu0 %v123
  %127 = vmatprep.subr.mxu0 0.0
  %128 = vmatpush1.msra.mxu0 0.0
  %129 = vmatprep.subr.mxu0 0.0
  %130 = vmatpush1.msra.mxu0 0.0
  %131 = vmatprep.subr.mxu0 0.0
  %132 = vmatpush1.msra.mxu0 0.0
  %133 = vmatprep.subr.mxu0 0.0
  %134 = vmatpush1.msra.mxu0 0.0
  %135 = vmatprep.subr.mxu0 0.0
  %136 = vmatpush1.msra.mxu0 0.0
  %137 = vmatprep.subr.mxu0 0.0
  %138 = vmatpush1.msra.mxu0 0.0
  %139 = vmatprep.subr.mxu0 0.0
  %140 = vmatpush1.msra.mxu0 0.0
  %141 = vmatprep.subr.mxu0 0.0
  %142 = vmatpush1.msra.mxu0 0.0
  %143 = vmatprep.subr.mxu0 0.0
  %144 = vmatpush1.msra.mxu0 0.0
  %145 = vmatprep.subr.mxu0 0.0
  %146 = vmatpush1.msra.mxu0 0.0
  %147 = vmatprep.subr.mxu0 0.0
  %148 = vmatpush1.msra.mxu0 0.0
  %149 = vmatprep.subr.mxu0 0.0
  %150 = vmatpush1.msra.mxu0 0.0
  %151 = vmatprep.subr.mxu0 0.0
  %152 = vmatpush1.msra.mxu0 0.0
  %153 = vmatprep.subr.mxu0 0.0
  %154 = vmatpush1.msra.mxu0 0.0
  %155 = vmatprep.subr.mxu0 0.0
  %156 = vmatpush1.msra.mxu0 0.0
  %157 = vmatprep.subr.mxu0 0.0
  %158 = vmatpush1.msra.mxu0 0.0
  %159 = vmatprep.subr.mxu0 0.0
  %160 = vmatpush1.msra.mxu0 0.0
  %161 = vmatprep.subr.mxu0 0.0
  %162 = vmatpush1.msra.mxu0 0.0
  %163 = vmatprep.subr.mxu0 0.0
  %164 = vmatpush1.msra.mxu0 0.0
  %165 = vmatprep.subr.mxu0 0.0
  %166 = vmatpush1.msra.mxu0 0.0
  %167 = vmatprep.subr.mxu0 0.0
  %168 = vmatpush1.msra.mxu0 0.0
  %169 = vmatprep.subr.mxu0 0.0
  %170 = vmatpush1.msra.mxu0 0.0
  %171 = vmatprep.subr.mxu0 0.0
  %172 = vmatpush1.msra.mxu0 0.0
  %173 = vmatprep.subr.mxu0 0.0
  %174 = vmatpush1.msra.mxu0 0.0
  %175 = vmatprep.subr.mxu0 0.0
  %176 = vmatpush1.msra.mxu0 0.0
  %177 = vmatprep.subr.mxu0 0.0
  %178 = vmatpush1.msra.mxu0 0.0
  %179 = vmatprep.subr.mxu0 0.0
  %180 = vmatpush1.msra.mxu0 0.0
  %181 = vmatprep.subr.mxu0 0.0
  %182 = vmatpush1.msra.mxu0 0.0
  %183 = vmatprep.subr.mxu0 0.0
  %184 = vmatpush1.msra.mxu0 0.0
  %185 = vmatprep.subr.mxu0 0.0
  %186 = vmatpush1.msra.mxu0 0.0
  %187 = vmatprep.subr.mxu0 0.0
  %188 = vmatpush1.msra.mxu0 0.0
  %189 = vmatprep.mubr.f32.mxu0 0.0
  %190 = vmatmul.mubr.f32.gmra.mrb[0].mxu0 %v119
  %v191 = vpop.f32.mrb[0].mxu0
  %v192 = vadd.f32 %v116, %v191
  %v193 = vpop.f32.mrb[0].mxu0
  %194 = vdwg.mxu0
  %v195 = vmax.f32 %v192, 0.0
  %vm196 = vcmask 59392
  %197 = vst.msk [vmem:[%s5] sm:$0x7] %vm196, %v195
  %198 = vset.pattern.permute.xlu0 3
  %199 = vperm.xlu0 %198, %v22
  %v200 = vpop.permute.xlu0 %199
  %v202 = vmul.f32 %v200, %v195
  %v203 = vsel %vm196, %v202, 0.0
  %v204 = vrot.slane %v203, 4
  %v205 = vadd.f32 %v203, %v204
  %v206 = vrot.slane %v205, 2
  %v207 = vadd.f32 %v205, %v206
  %v208 = vrot.slane %v207, 1
  %v209 = vadd.f32 %v207, %v208
  %211 = vset.pattern.permute.xlu0 4
  %212 = vperm.xlu0 %211, %v23
  %v213 = vpop.permute.xlu0 %212
  %v215 = vadd.f32 %v209, %v213
  %vm216 = vcmask 57344
  %217 = vst.msk [vmem:[%s6] sm:$0x1] %vm216, %v215
  // Predicated region
  $region22: #{graph_unet_forward.5} parent=0 // pred_check
    _
  $region23: #{graph_unet_forward.5} parent=0 // pred_check_branch
    %219 = sbr.rel (0) target = $region25
  $region24: #{graph_unet_forward.5} parent=0 // pred_region
    _
  $region25: #{graph_unet_forward.5} parent=0 // pred_fallthru
    _
  // Predicated region
  $region26: #{graph_unet_forward.5} parent=0 // pred_check
    _
  $region27: #{graph_unet_forward.5} parent=0 // pred_check_branch
    %221 = sbr.rel (0) target = $region29
  $region28: #{graph_unet_forward.5} parent=0 // pred_region
    _
  $region29: #{graph_unet_forward.5} parent=0 // pred_fallthru
    _
  // Predicated region
  $region30: #{graph_unet_forward.5} parent=0 // pred_check
    _
  $region31: #{graph_unet_forward.5} parent=0 // pred_check_branch
    %223 = sbr.rel (0) target = $region33
  $region32: #{graph_unet_forward.5} parent=0 // pred_region
    _
  $region33: #{graph_unet_forward.5} parent=0 // pred_fallthru
    _
  // Predicated region
  $region34: #{graph_unet_forward.5} parent=0 // pred_check
    _
  $region35: #{graph_unet_forward.5} parent=0 // pred_check_branch
    %225 = sbr.rel (0) target = $region37
  $region36: #{graph_unet_forward.5} parent=0 // pred_region
    _
  $region37: #{graph_unet_forward.5} parent=0 // pred_fallthru
    _

// kernel: graph_unet_forward.6
$region0: #{graph_unet_forward.6}
  #allocation0 [shape = 'u32[]', space=smem, size = 0x4, offset = 0x4, fixed_abs, tag = 'smem constant byte address 0x4 - core index']
  #allocation1 [shape = 'u32[144,128]{1,0:T(1,128)}', space=vmem, size = 0x12000, scoped, tag = 'internal scratch']
  %s0 = inlined_call_operand.vmem [shape: f32[8,8], index: 0, kind: input, shape index: {}]
  %s1 = inlined_call_operand.vmem [shape: f32[8,8], index: 1, kind: input, shape index: {}]
  %s2 = inlined_call_operand.vmem [shape: f32[3,8], index: 2, kind: input, shape index: {}]
  %s3 = inlined_call_operand.vmem [shape: f32[3,6], index: 3, kind: input, shape index: {}]
  %s4 = inlined_call_operand.vmem [shape: f32[8,8], index: 4, kind: output, shape index: {0}]
  %s5 = inlined_call_operand.vmem [shape: f32[1,8], index: 5, kind: output, shape index: {1}]
  %s6 = inlined_call_operand.vmem [shape: f32[3,8], index: 6, kind: output, shape index: {2}]
  %s7 = inlined_call_operand.vmem [shape: f32[1,8], index: 7, kind: output, shape index: {3}]
  %8 = xla_tuple %s4, %s5, %s6, %s7
  %s9 = sld [smem:[#allocation0]]
  $region50: #{graph_unet_forward.6} parent=0
    _
  %s11 = ssub.s32 1, %s9
  %s12 = scalar_select 0, %s11, %s9
  // Predicated region
  $region2: #{graph_unet_forward.6} parent=0 // pred_check
    _
  $region3: #{graph_unet_forward.6} parent=0 // pred_check_branch
    %14 = sbr.rel (0) target = $region5
  $region4: #{graph_unet_forward.6} parent=0 // pred_region
    _
  $region5: #{graph_unet_forward.6} parent=0 // pred_fallthru
    _
  // Predicated region
  $region6: #{graph_unet_forward.6} parent=0 // pred_check
    _
  $region7: #{graph_unet_forward.6} parent=0 // pred_check_branch
    %16 = sbr.rel (0) target = $region9
  $region8: #{graph_unet_forward.6} parent=0 // pred_region
    _
  $region9: #{graph_unet_forward.6} parent=0 // pred_fallthru
    _
  // Predicated region
  $region10: #{graph_unet_forward.6} parent=0 // pred_check
    _
  $region11: #{graph_unet_forward.6} parent=0 // pred_check_branch
    %18 = sbr.rel (0) target = $region13
  $region12: #{graph_unet_forward.6} parent=0 // pred_region
    _
  $region13: #{graph_unet_forward.6} parent=0 // pred_fallthru
    _
  // Predicated region
  $region14: #{graph_unet_forward.6} parent=0 // pred_check
    _
  $region15: #{graph_unet_forward.6} parent=0 // pred_check_branch
    %20 = sbr.rel (0) target = $region17
  $region16: #{graph_unet_forward.6} parent=0 // pred_region
    _
  $region17: #{graph_unet_forward.6} parent=0 // pred_fallthru
    _
  %v21 = vld [vmem:[%s3] sm:$0x7]
  %v22 = vld [vmem:[%s3] sm:$0x1]
  %v23 = vld [vmem:[%s0] sm:$0xff]
  %v24 = vld [vmem:[%s1] sm:$0xff]
  %v25 = vld [vmem:[%s2] sm:$0x7]
  %vm26 = vcmask 64512
  %v28 = vsel %vm26, %v23, 0
  %30 = vmatprep.subr.mxu0 0.0
  %31 = vmatpush1.msra.mxu0 %v24
  %32 = vmatprep.subr.mxu0 0.0
  %33 = vmatpush1.msra.mxu0 0.0
  %34 = vmatprep.subr.mxu0 0.0
  %35 = vmatpush1.msra.mxu0 0.0
  %36 = vmatprep.subr.mxu0 0.0
  %37 = vmatpush1.msra.mxu0 0.0
  %38 = vmatprep.subr.mxu0 0.0
  %39 = vmatpush1.msra.mxu0 0.0
  %40 = vmatprep.subr.mxu0 0.0
  %41 = vmatpush1.msra.mxu0 0.0
  %42 = vmatprep.subr.mxu0 0.0
  %43 = vmatpush1.msra.mxu0 0.0
  %44 = vmatprep.subr.mxu0 0.0
  %45 = vmatpush1.msra.mxu0 0.0
  %46 = vmatprep.subr.mxu0 0.0
  %47 = vmatpush1.msra.mxu0 0.0
  %48 = vmatprep.subr.mxu0 0.0
  %49 = vmatpush1.msra.mxu0 0.0
  %50 = vmatprep.subr.mxu0 0.0
  %51 = vmatpush1.msra.mxu0 0.0
  %52 = vmatprep.subr.mxu0 0.0
  %53 = vmatpush1.msra.mxu0 0.0
  %54 = vmatprep.subr.mxu0 0.0
  %55 = vmatpush1.msra.mxu0 0.0
  %56 = vmatprep.subr.mxu0 0.0
  %57 = vmatpush1.msra.mxu0 0.0
  %58 = vmatprep.subr.mxu0 0.0
  %59 = vmatpush1.msra.mxu0 0.0
  %60 = vmatprep.subr.mxu0 0.0
  %61 = vmatpush1.msra.mxu0 0.0
  %62 = vmatprep.subr.mxu0 0.0
  %63 = vmatpush1.msra.mxu0 0.0
  %64 = vmatprep.subr.mxu0 0.0
  %65 = vmatpush1.msra.mxu0 0.0
  %66 = vmatprep.subr.mxu0 0.0
  %67 = vmatpush1.msra.mxu0 0.0
  %68 = vmatprep.subr.mxu0 0.0
  %69 = vmatpush1.msra.mxu0 0.0
  %70 = vmatprep.subr.mxu0 0.0
  %71 = vmatpush1.msra.mxu0 0.0
  %72 = vmatprep.subr.mxu0 0.0
  %73 = vmatpush1.msra.mxu0 0.0
  %74 = vmatprep.subr.mxu0 0.0
  %75 = vmatpush1.msra.mxu0 0.0
  %76 = vmatprep.subr.mxu0 0.0
  %77 = vmatpush1.msra.mxu0 0.0
  %78 = vmatprep.subr.mxu0 0.0
  %79 = vmatpush1.msra.mxu0 0.0
  %80 = vmatprep.subr.mxu0 0.0
  %81 = vmatpush1.msra.mxu0 0.0
  %82 = vmatprep.subr.mxu0 0.0
  %83 = vmatpush1.msra.mxu0 0.0
  %84 = vmatprep.subr.mxu0 0.0
  %85 = vmatpush1.msra.mxu0 0.0
  %86 = vmatprep.subr.mxu0 0.0
  %87 = vmatpush1.msra.mxu0 0.0
  %88 = vmatprep.subr.mxu0 0.0
  %89 = vmatpush1.msra.mxu0 0.0
  %90 = vmatprep.subr.mxu0 0.0
  %91 = vmatpush1.msra.mxu0 0.0
  %92 = vmatprep.subr.mxu0 0.0
  %93 = vmatpush1.msra.mxu0 0.0
  %94 = vmatprep.mubr.f32.mxu0 0.0
  %95 = vmatmul.mubr.f32.gmra.mrb[0].mxu0 %v28
  %v96 = vpop.f32.mrb[0].mxu0
  %v97 = vadd.f32 0.0, %v96
  %v98 = vpop.f32.mrb[0].mxu0
  %99 = vdwg.mxu0
  %v101 = vsel %vm26, 1.0, 0
  %v104 = vsel %vm26, %v97, 0
  %106 = vmatprep.subr.mxu0 0.0
  %107 = vmatpush1.xpose.msra.mxu0 %v104
  %108 = vmatprep.subr.mxu0 0.0
  %109 = vmatpush1.xpose.msra.mxu0 0.0
  %110 = vmatprep.subr.mxu0 0.0
  %111 = vmatpush1.xpose.msra.mxu0 0.0
  %112 = vmatprep.subr.mxu0 0.0
  %113 = vmatpush1.xpose.msra.mxu0 0.0
  %114 = vmatprep.subr.mxu0 0.0
  %115 = vmatpush1.xpose.msra.mxu0 0.0
  %116 = vmatprep.subr.mxu0 0.0
  %117 = vmatpush1.xpose.msra.mxu0 0.0
  %118 = vmatprep.subr.mxu0 0.0
  %119 = vmatpush1.xpose.msra.mxu0 0.0
  %120 = vmatprep.subr.mxu0 0.0
  %121 = vmatpush1.xpose.msra.mxu0 0.0
  %122 = vmatprep.subr.mxu0 0.0
  %123 = vmatpush1.xpose.msra.mxu0 0.0
  %124 = vmatprep.subr.mxu0 0.0
  %125 = vmatpush1.xpose.msra.mxu0 0.0
  %126 = vmatprep.subr.mxu0 0.0
  %127 = vmatpush1.xpose.msra.mxu0 0.0
  %128 = vmatprep.subr.mxu0 0.0
  %129 = vmatpush1.xpose.msra.mxu0 0.0
  %130 = vmatprep.subr.mxu0 0.0
  %131 = vmatpush1.xpose.msra.mxu0 0.0
  %132 = vmatprep.subr.mxu0 0.0
  %133 = vmatpush1.xpose.msra.mxu0 0.0
  %134 = vmatprep.subr.mxu0 0.0
  %135 = vmatpush1.xpose.msra.mxu0 0.0
  %136 = vmatprep.subr.mxu0 0.0
  %137 = vmatpush1.xpose.msra.mxu0 0.0
  %138 = vmatprep.subr.mxu0 0.0
  %139 = vmatpush1.xpose.msra.mxu0 0.0
  %140 = vmatprep.subr.mxu0 0.0
  %141 = vmatpush1.xpose.msra.mxu0 0.0
  %142 = vmatprep.subr.mxu0 0.0
  %143 = vmatpush1.xpose.msra.mxu0 0.0
  %144 = vmatprep.subr.mxu0 0.0
  %145 = vmatpush1.xpose.msra.mxu0 0.0
  %146 = vmatprep.subr.mxu0 0.0
  %147 = vmatpush1.xpose.msra.mxu0 0.0
  %148 = vmatprep.subr.mxu0 0.0
  %149 = vmatpush1.xpose.msra.mxu0 0.0
  %150 = vmatprep.subr.mxu0 0.0
  %151 = vmatpush1.xpose.msra.mxu0 0.0
  %152 = vmatprep.subr.mxu0 0.0
  %153 = vmatpush1.xpose.msra.mxu0 0.0
  %154 = vmatprep.subr.mxu0 0.0
  %155 = vmatpush1.xpose.msra.mxu0 0.0
  %156 = vmatprep.subr.mxu0 0.0
  %157 = vmatpush1.xpose.msra.mxu0 0.0
  %158 = vmatprep.subr.mxu0 0.0
  %159 = vmatpush1.xpose.msra.mxu0 0.0
  %160 = vmatprep.subr.mxu0 0.0
  %161 = vmatpush1.xpose.msra.mxu0 0.0
  %162 = vmatprep.subr.mxu0 0.0
  %163 = vmatpush1.xpose.msra.mxu0 0.0
  %164 = vmatprep.subr.mxu0 0.0
  %165 = vmatpush1.xpose.msra.mxu0 0.0
  %166 = vmatprep.subr.mxu0 0.0
  %167 = vmatpush1.xpose.msra.mxu0 0.0
  %168 = vmatprep.subr.mxu0 0.0
  %169 = vmatpush1.xpose.msra.mxu0 0.0
  %170 = vmatprep.mubr.f32.mxu0 0.0
  %171 = vmatmul.mubr.f32.gmra.mrb[0].mxu0 %v101
  %v172 = vpop.f32.mrb[0].mxu0
  %v173 = vadd.f32 2.0, %v172
  %v174 = vpop.f32.mrb[0].mxu0
  %175 = vdwg.mxu0
  %v176 = vrsqrt.pop %v173
  %v177 = vlaneseq
  %v178 = vshrl.u32 %v177, 7
  %v179 = vsub.s32 0, %v178
  %v180 = vrot.slane %v176, %v179
  %v181 = vmul.f32 %v25, %v180
  %v182 = vmul.f32 %v181, 2.0
  %v184 = vsel %vm26, %v181, 0
  %186 = vmatprep.subr.mxu0 0.0
  %187 = vmatpush1.xpose.msra.mxu0 %v104
  %188 = vmatprep.subr.mxu0 0.0
  %189 = vmatpush1.xpose.msra.mxu0 0.0
  %190 = vmatprep.subr.mxu0 0.0
  %191 = vmatpush1.xpose.msra.mxu0 0.0
  %192 = vmatprep.subr.mxu0 0.0
  %193 = vmatpush1.xpose.msra.mxu0 0.0
  %194 = vmatprep.subr.mxu0 0.0
  %195 = vmatpush1.xpose.msra.mxu0 0.0
  %196 = vmatprep.subr.mxu0 0.0
  %197 = vmatpush1.xpose.msra.mxu0 0.0
  %198 = vmatprep.subr.mxu0 0.0
  %199 = vmatpush1.xpose.msra.mxu0 0.0
  %200 = vmatprep.subr.mxu0 0.0
  %201 = vmatpush1.xpose.msra.mxu0 0.0
  %202 = vmatprep.subr.mxu0 0.0
  %203 = vmatpush1.xpose.msra.mxu0 0.0
  %204 = vmatprep.subr.mxu0 0.0
  %205 = vmatpush1.xpose.msra.mxu0 0.0
  %206 = vmatprep.subr.mxu0 0.0
  %207 = vmatpush1.xpose.msra.mxu0 0.0
  %208 = vmatprep.subr.mxu0 0.0
  %209 = vmatpush1.xpose.msra.mxu0 0.0
  %210 = vmatprep.subr.mxu0 0.0
  %211 = vmatpush1.xpose.msra.mxu0 0.0
  %212 = vmatprep.subr.mxu0 0.0
  %213 = vmatpush1.xpose.msra.mxu0 0.0
  %214 = vmatprep.subr.mxu0 0.0
  %215 = vmatpush1.xpose.msra.mxu0 0.0
  %216 = vmatprep.subr.mxu0 0.0
  %217 = vmatpush1.xpose.msra.mxu0 0.0
  %218 = vmatprep.subr.mxu0 0.0
  %219 = vmatpush1.xpose.msra.mxu0 0.0
  %220 = vmatprep.subr.mxu0 0.0
  %221 = vmatpush1.xpose.msra.mxu0 0.0
  %222 = vmatprep.subr.mxu0 0.0
  %223 = vmatpush1.xpose.msra.mxu0 0.0
  %224 = vmatprep.subr.mxu0 0.0
  %225 = vmatpush1.xpose.msra.mxu0 0.0
  %226 = vmatprep.subr.mxu0 0.0
  %227 = vmatpush1.xpose.msra.mxu0 0.0
  %228 = vmatprep.subr.mxu0 0.0
  %229 = vmatpush1.xpose.msra.mxu0 0.0
  %230 = vmatprep.subr.mxu0 0.0
  %231 = vmatpush1.xpose.msra.mxu0 0.0
  %232 = vmatprep.subr.mxu0 0.0
  %233 = vmatpush1.xpose.msra.mxu0 0.0
  %234 = vmatprep.subr.mxu0 0.0
  %235 = vmatpush1.xpose.msra.mxu0 0.0
  %236 = vmatprep.subr.mxu0 0.0
  %237 = vmatpush1.xpose.msra.mxu0 0.0
  %238 = vmatprep.subr.mxu0 0.0
  %239 = vmatpush1.xpose.msra.mxu0 0.0
  %240 = vmatprep.subr.mxu0 0.0
  %241 = vmatpush1.xpose.msra.mxu0 0.0
  %242 = vmatprep.subr.mxu0 0.0
  %243 = vmatpush1.xpose.msra.mxu0 0.0
  %244 = vmatprep.subr.mxu0 0.0
  %245 = vmatpush1.xpose.msra.mxu0 0.0
  %246 = vmatprep.subr.mxu0 0.0
  %247 = vmatpush1.xpose.msra.mxu0 0.0
  %248 = vmatprep.subr.mxu0 0.0
  %249 = vmatpush1.xpose.msra.mxu0 0.0
  %250 = vmatprep.mubr.f32.mxu0 0.0
  %251 = vmatmul.mubr.f32.gmra.mrb[0].mxu0 %v184
  %v252 = vpop.f32.mrb[0].mxu0
  %v253 = vadd.f32 %v182, %v252
  %v254 = vpop.f32.mrb[0].mxu0
  %255 = vdwg.mxu0
  %v256 = vmul.f32 %v180, %v253
  %258 = vset.pattern.permute.xlu0 3
  %259 = vperm.xlu0 %258, %v21
  %v260 = vpop.permute.xlu0 %259
  %vm262 = vcmask 23552
  %v263 = vsel %vm262, %v21, 0
  %vm265 = vcmask 1042432
  %v267 = vsel %vm265, %v256, 0
  %269 = vmatprep.subr.mxu0 0.0
  %270 = vmatpush1.msra.mxu0 %v267
  %271 = vmatprep.subr.mxu0 0.0
  %272 = vmatpush1.msra.mxu0 0.0
  %273 = vmatprep.subr.mxu0 0.0
  %274 = vmatpush1.msra.mxu0 0.0
  %275 = vmatprep.subr.mxu0 0.0
  %276 = vmatpush1.msra.mxu0 0.0
  %277 = vmatprep.subr.mxu0 0.0
  %278 = vmatpush1.msra.mxu0 0.0
  %279 = vmatprep.subr.mxu0 0.0
  %280 = vmatpush1.msra.mxu0 0.0
  %281 = vmatprep.subr.mxu0 0.0
  %282 = vmatpush1.msra.mxu0 0.0
  %283 = vmatprep.subr.mxu0 0.0
  %284 = vmatpush1.msra.mxu0 0.0
  %285 = vmatprep.subr.mxu0 0.0
  %286 = vmatpush1.msra.mxu0 0.0
  %287 = vmatprep.subr.mxu0 0.0
  %288 = vmatpush1.msra.mxu0 0.0
  %289 = vmatprep.subr.mxu0 0.0
  %290 = vmatpush1.msra.mxu0 0.0
  %291 = vmatprep.subr.mxu0 0.0
  %292 = vmatpush1.msra.mxu0 0.0
  %293 = vmatprep.subr.mxu0 0.0
  %294 = vmatpush1.msra.mxu0 0.0
  %295 = vmatprep.subr.mxu0 0.0
  %296 = vmatpush1.msra.mxu0 0.0
  %297 = vmatprep.subr.mxu0 0.0
  %298 = vmatpush1.msra.mxu0 0.0
  %299 = vmatprep.subr.mxu0 0.0
  %300 = vmatpush1.msra.mxu0 0.0
  %301 = vmatprep.subr.mxu0 0.0
  %302 = vmatpush1.msra.mxu0 0.0
  %303 = vmatprep.subr.mxu0 0.0
  %304 = vmatpush1.msra.mxu0 0.0
  %305 = vmatprep.subr.mxu0 0.0
  %306 = vmatpush1.msra.mxu0 0.0
  %307 = vmatprep.subr.mxu0 0.0
  %308 = vmatpush1.msra.mxu0 0.0
  %309 = vmatprep.subr.mxu0 0.0
  %310 = vmatpush1.msra.mxu0 0.0
  %311 = vmatprep.subr.mxu0 0.0
  %312 = vmatpush1.msra.mxu0 0.0
  %313 = vmatprep.subr.mxu0 0.0
  %314 = vmatpush1.msra.mxu0 0.0
  %315 = vmatprep.subr.mxu0 0.0
  %316 = vmatpush1.msra.mxu0 0.0
  %317 = vmatprep.subr.mxu0 0.0
  %318 = vmatpush1.msra.mxu0 0.0
  %319 = vmatprep.subr.mxu0 0.0
  %320 = vmatpush1.msra.mxu0 0.0
  %321 = vmatprep.subr.mxu0 0.0
  %322 = vmatpush1.msra.mxu0 0.0
  %323 = vmatprep.subr.mxu0 0.0
  %324 = vmatpush1.msra.mxu0 0.0
  %325 = vmatprep.subr.mxu0 0.0
  %326 = vmatpush1.msra.mxu0 0.0
  %327 = vmatprep.subr.mxu0 0.0
  %328 = vmatpush1.msra.mxu0 0.0
  %329 = vmatprep.subr.mxu0 0.0
  %330 = vmatpush1.msra.mxu0 0.0
  %331 = vmatprep.subr.mxu0 0.0
  %332 = vmatpush1.msra.mxu0 0.0
  %333 = vmatprep.mubr.f32.mxu0 0.0
  %334 = vmatmul.mubr.f32.gmra.mrb[0].mxu0 %v263
  %v335 = vpop.f32.mrb[0].mxu0
  %v336 = vadd.f32 %v260, %v335
  %v337 = vpop.f32.mrb[0].mxu0
  %338 = vdwg.mxu0
  %v339 = vmax.f32 %v336, 0.0
  %340 = vst.msk [vmem:[%s4] sm:$0xff] %vm26, %v97
  %vm341 = vcmask 57344
  %342 = vst.msk [vmem:[%s5] sm:$0x1] %vm341, %v176
  %vm343 = vcmask 59392
  %344 = vst.msk [vmem:[%s6] sm:$0x7] %vm343, %v339
  %345 = vset.pattern.permute.xlu0 4
  %346 = vperm.xlu0 %345, %v21
  %v347 = vpop.permute.xlu0 %346
  %v349 = vmul.f32 %v347, %v339
  %v350 = vsel %vm343, %v349, 0.0
  %v351 = vrot.slane %v350, 4
  %v352 = vadd.f32 %v350, %v351
  %v353 = vrot.slane %v352, 2
  %v354 = vadd.f32 %v352, %v353
  %v355 = vrot.slane %v354, 1
  %v356 = vadd.f32 %v354, %v355
  %358 = vset.pattern.permute.xlu0 5
  %359 = vperm.xlu0 %358, %v22
  %v360 = vpop.permute.xlu0 %359
  %v362 = vadd.f32 %v356, %v360
  %363 = vst.msk [vmem:[%s7] sm:$0x1] %vm341, %v362
  // Predicated region
  $region18: #{graph_unet_forward.6} parent=0 // pred_check
    _
  $region19: #{graph_unet_forward.6} parent=0 // pred_check_branch
    %365 = sbr.rel (0) target = $region21
  $region20: #{graph_unet_forward.6} parent=0 // pred_region
    _
  $region21: #{graph_unet_forward.6} parent=0 // pred_fallthru
    _
  // Predicated region
  $region22: #{graph_unet_forward.6} parent=0 // pred_check
    _
  $region23: #{graph_unet_forward.6} parent=0 // pred_check_branch
    %367 = sbr.rel (0) target = $region25
  $region24: #{graph_unet_forward.6} parent=0 // pred_region
    _
  $region25: #{graph_unet_forward.6} parent=0 // pred_fallthru
    _
  // Predicated region
  $region26: #{graph_unet_forward.6} parent=0 // pred_check
    _
  $region27: #{graph_unet_forward.6} parent=0 // pred_check_branch
    %369 = sbr.rel (0) target = $region29
  $region28: #{graph_unet_forward.6} parent=0 // pred_region
    _
  $region29: #{graph_unet_forward.6} parent=0 // pred_fallthru
    _
  // Predicated region
  $region30: #{graph_unet_forward.6} parent=0 // pred_check
    _
  $region31: #{graph_unet_forward.6} parent=0 // pred_check_branch
    %371 = sbr.rel (0) target = $region33
  $region32: #{graph_unet_forward.6} parent=0 // pred_region
    _
  $region33: #{graph_unet_forward.6} parent=0 // pred_fallthru
    _
  // Predicated region
  $region34: #{graph_unet_forward.6} parent=0 // pred_check
    _
  $region35: #{graph_unet_forward.6} parent=0 // pred_check_branch
    %373 = sbr.rel (0) target = $region37
  $region36: #{graph_unet_forward.6} parent=0 // pred_region
    _
  $region37: #{graph_unet_forward.6} parent=0 // pred_fallthru
    _
  // Predicated region
  $region38: #{graph_unet_forward.6} parent=0 // pred_check
    _
  $region39: #{graph_unet_forward.6} parent=0 // pred_check_branch
    %375 = sbr.rel (0) target = $region41
  $region40: #{graph_unet_forward.6} parent=0 // pred_region
    _
  $region41: #{graph_unet_forward.6} parent=0 // pred_fallthru
    _
  // Predicated region
  $region42: #{graph_unet_forward.6} parent=0 // pred_check
    _
  $region43: #{graph_unet_forward.6} parent=0 // pred_check_branch
    %377 = sbr.rel (0) target = $region45
  $region44: #{graph_unet_forward.6} parent=0 // pred_region
    _
  $region45: #{graph_unet_forward.6} parent=0 // pred_fallthru
    _
  // Predicated region
  $region46: #{graph_unet_forward.6} parent=0 // pred_check
    _
  $region47: #{graph_unet_forward.6} parent=0 // pred_check_branch
    %379 = sbr.rel (0) target = $region49
  $region48: #{graph_unet_forward.6} parent=0 // pred_region
    _
  $region49: #{graph_unet_forward.6} parent=0 // pred_fallthru
    _

// kernel: graph_unet_forward.7
$region0: #{graph_unet_forward.7}
  #allocation0 [shape = 'u32[]', space=smem, size = 0x4, offset = 0x4, fixed_abs, tag = 'smem constant byte address 0x4 - core index']
  #allocation1 [shape = 'u32[144,128]{1,0:T(1,128)}', space=vmem, size = 0x12000, scoped, tag = 'internal scratch']
  %s0 = inlined_call_operand.vmem [shape: f32[8,8], index: 0, kind: input, shape index: {}]
  %s1 = inlined_call_operand.vmem [shape: f32[8,8], index: 1, kind: input, shape index: {}]
  %s2 = inlined_call_operand.vmem [shape: f32[3,8], index: 2, kind: input, shape index: {}]
  %s3 = inlined_call_operand.vmem [shape: f32[3,4], index: 3, kind: input, shape index: {}]
  %s4 = inlined_call_operand.vmem [shape: f32[3,8], index: 4, kind: output, shape index: {}]
  %s5 = sld [smem:[#allocation0]]
  $region26: #{graph_unet_forward.7} parent=0
    _
  %s7 = ssub.s32 1, %s5
  %s8 = scalar_select 0, %s7, %s5
  // Predicated region
  $region2: #{graph_unet_forward.7} parent=0 // pred_check
    _
  $region3: #{graph_unet_forward.7} parent=0 // pred_check_branch
    %10 = sbr.rel (0) target = $region5
  $region4: #{graph_unet_forward.7} parent=0 // pred_region
    _
  $region5: #{graph_unet_forward.7} parent=0 // pred_fallthru
    _
  // Predicated region
  $region6: #{graph_unet_forward.7} parent=0 // pred_check
    _
  $region7: #{graph_unet_forward.7} parent=0 // pred_check_branch
    %12 = sbr.rel (0) target = $region9
  $region8: #{graph_unet_forward.7} parent=0 // pred_region
    _
  $region9: #{graph_unet_forward.7} parent=0 // pred_fallthru
    _
  // Predicated region
  $region10: #{graph_unet_forward.7} parent=0 // pred_check
    _
  $region11: #{graph_unet_forward.7} parent=0 // pred_check_branch
    %14 = sbr.rel (0) target = $region13
  $region12: #{graph_unet_forward.7} parent=0 // pred_region
    _
  $region13: #{graph_unet_forward.7} parent=0 // pred_fallthru
    _
  // Predicated region
  $region14: #{graph_unet_forward.7} parent=0 // pred_check
    _
  $region15: #{graph_unet_forward.7} parent=0 // pred_check_branch
    %16 = sbr.rel (0) target = $region17
  $region16: #{graph_unet_forward.7} parent=0 // pred_region
    _
  $region17: #{graph_unet_forward.7} parent=0 // pred_fallthru
    _
  %v17 = vld [vmem:[%s3] sm:$0x7]
  %v18 = vld [vmem:[%s0] sm:$0xff]
  %v19 = vld [vmem:[%s1] sm:$0xff]
  %v20 = vld [vmem:[%s2] sm:$0x7]
  %vm21 = vcmask 64512
  %v23 = vsel %vm21, %v18, 0
  %25 = vmatprep.subr.mxu0 0.0
  %26 = vmatpush1.msra.mxu0 %v19
  %27 = vmatprep.subr.mxu0 0.0
  %28 = vmatpush1.msra.mxu0 0.0
  %29 = vmatprep.subr.mxu0 0.0
  %30 = vmatpush1.msra.mxu0 0.0
  %31 = vmatprep.subr.mxu0 0.0
  %32 = vmatpush1.msra.mxu0 0.0
  %33 = vmatprep.subr.mxu0 0.0
  %34 = vmatpush1.msra.mxu0 0.0
  %35 = vmatprep.subr.mxu0 0.0
  %36 = vmatpush1.msra.mxu0 0.0
  %37 = vmatprep.subr.mxu0 0.0
  %38 = vmatpush1.msra.mxu0 0.0
  %39 = vmatprep.subr.mxu0 0.0
  %40 = vmatpush1.msra.mxu0 0.0
  %41 = vmatprep.subr.mxu0 0.0
  %42 = vmatpush1.msra.mxu0 0.0
  %43 = vmatprep.subr.mxu0 0.0
  %44 = vmatpush1.msra.mxu0 0.0
  %45 = vmatprep.subr.mxu0 0.0
  %46 = vmatpush1.msra.mxu0 0.0
  %47 = vmatprep.subr.mxu0 0.0
  %48 = vmatpush1.msra.mxu0 0.0
  %49 = vmatprep.subr.mxu0 0.0
  %50 = vmatpush1.msra.mxu0 0.0
  %51 = vmatprep.subr.mxu0 0.0
  %52 = vmatpush1.msra.mxu0 0.0
  %53 = vmatprep.subr.mxu0 0.0
  %54 = vmatpush1.msra.mxu0 0.0
  %55 = vmatprep.subr.mxu0 0.0
  %56 = vmatpush1.msra.mxu0 0.0
  %57 = vmatprep.subr.mxu0 0.0
  %58 = vmatpush1.msra.mxu0 0.0
  %59 = vmatprep.subr.mxu0 0.0
  %60 = vmatpush1.msra.mxu0 0.0
  %61 = vmatprep.subr.mxu0 0.0
  %62 = vmatpush1.msra.mxu0 0.0
  %63 = vmatprep.subr.mxu0 0.0
  %64 = vmatpush1.msra.mxu0 0.0
  %65 = vmatprep.subr.mxu0 0.0
  %66 = vmatpush1.msra.mxu0 0.0
  %67 = vmatprep.subr.mxu0 0.0
  %68 = vmatpush1.msra.mxu0 0.0
  %69 = vmatprep.subr.mxu0 0.0
  %70 = vmatpush1.msra.mxu0 0.0
  %71 = vmatprep.subr.mxu0 0.0
  %72 = vmatpush1.msra.mxu0 0.0
  %73 = vmatprep.subr.mxu0 0.0
  %74 = vmatpush1.msra.mxu0 0.0
  %75 = vmatprep.subr.mxu0 0.0
  %76 = vmatpush1.msra.mxu0 0.0
  %77 = vmatprep.subr.mxu0 0.0
  %78 = vmatpush1.msra.mxu0 0.0
  %79 = vmatprep.subr.mxu0 0.0
  %80 = vmatpush1.msra.mxu0 0.0
  %81 = vmatprep.subr.mxu0 0.0
  %82 = vmatpush1.msra.mxu0 0.0
  %83 = vmatprep.subr.mxu0 0.0
  %84 = vmatpush1.msra.mxu0 0.0
  %85 = vmatprep.subr.mxu0 0.0
  %86 = vmatpush1.msra.mxu0 0.0
  %87 = vmatprep.subr.mxu0 0.0
  %88 = vmatpush1.msra.mxu0 0.0
  %89 = vmatprep.mubr.f32.mxu0 0.0
  %90 = vmatmul.mubr.f32.gmra.mrb[0].mxu0 %v23
  %v91 = vpop.f32.mrb[0].mxu0
  %v92 = vadd.f32 0.0, %v91
  %v93 = vpop.f32.mrb[0].mxu0
  %94 = vdwg.mxu0
  %v96 = vsel %vm21, 1.0, 0
  %v99 = vsel %vm21, %v92, 0
  %101 = vmatprep.subr.mxu0 0.0
  %102 = vmatpush1.xpose.msra.mxu0 %v99
  %103 = vmatprep.subr.mxu0 0.0
  %104 = vmatpush1.xpose.msra.mxu0 0.0
  %105 = vmatprep.subr.mxu0 0.0
  %106 = vmatpush1.xpose.msra.mxu0 0.0
  %107 = vmatprep.subr.mxu0 0.0
  %108 = vmatpush1.xpose.msra.mxu0 0.0
  %109 = vmatprep.subr.mxu0 0.0
  %110 = vmatpush1.xpose.msra.mxu0 0.0
  %111 = vmatprep.subr.mxu0 0.0
  %112 = vmatpush1.xpose.msra.mxu0 0.0
  %113 = vmatprep.subr.mxu0 0.0
  %114 = vmatpush1.xpose.msra.mxu0 0.0
  %115 = vmatprep.subr.mxu0 0.0
  %116 = vmatpush1.xpose.msra.mxu0 0.0
  %117 = vmatprep.subr.mxu0 0.0
  %118 = vmatpush1.xpose.msra.mxu0 0.0
  %119 = vmatprep.subr.mxu0 0.0
  %120 = vmatpush1.xpose.msra.mxu0 0.0
  %121 = vmatprep.subr.mxu0 0.0
  %122 = vmatpush1.xpose.msra.mxu0 0.0
  %123 = vmatprep.subr.mxu0 0.0
  %124 = vmatpush1.xpose.msra.mxu0 0.0
  %125 = vmatprep.subr.mxu0 0.0
  %126 = vmatpush1.xpose.msra.mxu0 0.0
  %127 = vmatprep.subr.mxu0 0.0
  %128 = vmatpush1.xpose.msra.mxu0 0.0
  %129 = vmatprep.subr.mxu0 0.0
  %130 = vmatpush1.xpose.msra.mxu0 0.0
  %131 = vmatprep.subr.mxu0 0.0
  %132 = vmatpush1.xpose.msra.mxu0 0.0
  %133 = vmatprep.subr.mxu0 0.0
  %134 = vmatpush1.xpose.msra.mxu0 0.0
  %135 = vmatprep.subr.mxu0 0.0
  %136 = vmatpush1.xpose.msra.mxu0 0.0
  %137 = vmatprep.subr.mxu0 0.0
  %138 = vmatpush1.xpose.msra.mxu0 0.0
  %139 = vmatprep.subr.mxu0 0.0
  %140 = vmatpush1.xpose.msra.mxu0 0.0
  %141 = vmatprep.subr.mxu0 0.0
  %142 = vmatpush1.xpose.msra.mxu0 0.0
  %143 = vmatprep.subr.mxu0 0.0
  %144 = vmatpush1.xpose.msra.mxu0 0.0
  %145 = vmatprep.subr.mxu0 0.0
  %146 = vmatpush1.xpose.msra.mxu0 0.0
  %147 = vmatprep.subr.mxu0 0.0
  %148 = vmatpush1.xpose.msra.mxu0 0.0
  %149 = vmatprep.subr.mxu0 0.0
  %150 = vmatpush1.xpose.msra.mxu0 0.0
  %151 = vmatprep.subr.mxu0 0.0
  %152 = vmatpush1.xpose.msra.mxu0 0.0
  %153 = vmatprep.subr.mxu0 0.0
  %154 = vmatpush1.xpose.msra.mxu0 0.0
  %155 = vmatprep.subr.mxu0 0.0
  %156 = vmatpush1.xpose.msra.mxu0 0.0
  %157 = vmatprep.subr.mxu0 0.0
  %158 = vmatpush1.xpose.msra.mxu0 0.0
  %159 = vmatprep.subr.mxu0 0.0
  %160 = vmatpush1.xpose.msra.mxu0 0.0
  %161 = vmatprep.subr.mxu0 0.0
  %162 = vmatpush1.xpose.msra.mxu0 0.0
  %163 = vmatprep.subr.mxu0 0.0
  %164 = vmatpush1.xpose.msra.mxu0 0.0
  %165 = vmatprep.mubr.f32.mxu0 0.0
  %166 = vmatmul.mubr.f32.gmra.mrb[0].mxu0 %v96
  %v167 = vpop.f32.mrb[0].mxu0
  %v168 = vadd.f32 2.0, %v167
  %v169 = vpop.f32.mrb[0].mxu0
  %170 = vdwg.mxu0
  %v171 = vrsqrt.pop %v168
  %v172 = vlaneseq
  %v173 = vshrl.u32 %v172, 7
  %v174 = vsub.s32 0, %v173
  %v175 = vrot.slane %v171, %v174
  %v176 = vmul.f32 %v20, %v175
  %v177 = vmul.f32 %v176, 2.0
  %v179 = vsel %vm21, %v176, 0
  %181 = vmatprep.subr.mxu0 0.0
  %182 = vmatpush1.xpose.msra.mxu0 %v99
  %183 = vmatprep.subr.mxu0 0.0
  %184 = vmatpush1.xpose.msra.mxu0 0.0
  %185 = vmatprep.subr.mxu0 0.0
  %186 = vmatpush1.xpose.msra.mxu0 0.0
  %187 = vmatprep.subr.mxu0 0.0
  %188 = vmatpush1.xpose.msra.mxu0 0.0
  %189 = vmatprep.subr.mxu0 0.0
  %190 = vmatpush1.xpose.msra.mxu0 0.0
  %191 = vmatprep.subr.mxu0 0.0
  %192 = vmatpush1.xpose.msra.mxu0 0.0
  %193 = vmatprep.subr.mxu0 0.0
  %194 = vmatpush1.xpose.msra.mxu0 0.0
  %195 = vmatprep.subr.mxu0 0.0
  %196 = vmatpush1.xpose.msra.mxu0 0.0
  %197 = vmatprep.subr.mxu0 0.0
  %198 = vmatpush1.xpose.msra.mxu0 0.0
  %199 = vmatprep.subr.mxu0 0.0
  %200 = vmatpush1.xpose.msra.mxu0 0.0
  %201 = vmatprep.subr.mxu0 0.0
  %202 = vmatpush1.xpose.msra.mxu0 0.0
  %203 = vmatprep.subr.mxu0 0.0
  %204 = vmatpush1.xpose.msra.mxu0 0.0
  %205 = vmatprep.subr.mxu0 0.0
  %206 = vmatpush1.xpose.msra.mxu0 0.0
  %207 = vmatprep.subr.mxu0 0.0
  %208 = vmatpush1.xpose.msra.mxu0 0.0
  %209 = vmatprep.subr.mxu0 0.0
  %210 = vmatpush1.xpose.msra.mxu0 0.0
  %211 = vmatprep.subr.mxu0 0.0
  %212 = vmatpush1.xpose.msra.mxu0 0.0
  %213 = vmatprep.subr.mxu0 0.0
  %214 = vmatpush1.xpose.msra.mxu0 0.0
  %215 = vmatprep.subr.mxu0 0.0
  %216 = vmatpush1.xpose.msra.mxu0 0.0
  %217 = vmatprep.subr.mxu0 0.0
  %218 = vmatpush1.xpose.msra.mxu0 0.0
  %219 = vmatprep.subr.mxu0 0.0
  %220 = vmatpush1.xpose.msra.mxu0 0.0
  %221 = vmatprep.subr.mxu0 0.0
  %222 = vmatpush1.xpose.msra.mxu0 0.0
  %223 = vmatprep.subr.mxu0 0.0
  %224 = vmatpush1.xpose.msra.mxu0 0.0
  %225 = vmatprep.subr.mxu0 0.0
  %226 = vmatpush1.xpose.msra.mxu0 0.0
  %227 = vmatprep.subr.mxu0 0.0
  %228 = vmatpush1.xpose.msra.mxu0 0.0
  %229 = vmatprep.subr.mxu0 0.0
  %230 = vmatpush1.xpose.msra.mxu0 0.0
  %231 = vmatprep.subr.mxu0 0.0
  %232 = vmatpush1.xpose.msra.mxu0 0.0
  %233 = vmatprep.subr.mxu0 0.0
  %234 = vmatpush1.xpose.msra.mxu0 0.0
  %235 = vmatprep.subr.mxu0 0.0
  %236 = vmatpush1.xpose.msra.mxu0 0.0
  %237 = vmatprep.subr.mxu0 0.0
  %238 = vmatpush1.xpose.msra.mxu0 0.0
  %239 = vmatprep.subr.mxu0 0.0
  %240 = vmatpush1.xpose.msra.mxu0 0.0
  %241 = vmatprep.subr.mxu0 0.0
  %242 = vmatpush1.xpose.msra.mxu0 0.0
  %243 = vmatprep.subr.mxu0 0.0
  %244 = vmatpush1.xpose.msra.mxu0 0.0
  %245 = vmatprep.mubr.f32.mxu0 0.0
  %246 = vmatmul.mubr.f32.gmra.mrb[0].mxu0 %v179
  %v247 = vpop.f32.mrb[0].mxu0
  %v248 = vadd.f32 %v177, %v247
  %v249 = vpop.f32.mrb[0].mxu0
  %250 = vdwg.mxu0
  %v251 = vmul.f32 %v175, %v248
  %253 = vset.pattern.permute.xlu0 3
  %254 = vperm.xlu0 %253, %v17
  %v255 = vpop.permute.xlu0 %254
  %vm257 = vcmask 23552
  %v258 = vsel %vm257, %v17, 0
  %vm260 = vcmask 1042432
  %v262 = vsel %vm260, %v251, 0
  %264 = vmatprep.subr.mxu0 0.0
  %265 = vmatpush1.msra.mxu0 %v262
  %266 = vmatprep.subr.mxu0 0.0
  %267 = vmatpush1.msra.mxu0 0.0
  %268 = vmatprep.subr.mxu0 0.0
  %269 = vmatpush1.msra.mxu0 0.0
  %270 = vmatprep.subr.mxu0 0.0
  %271 = vmatpush1.msra.mxu0 0.0
  %272 = vmatprep.subr.mxu0 0.0
  %273 = vmatpush1.msra.mxu0 0.0
  %274 = vmatprep.subr.mxu0 0.0
  %275 = vmatpush1.msra.mxu0 0.0
  %276 = vmatprep.subr.mxu0 0.0
  %277 = vmatpush1.msra.mxu0 0.0
  %278 = vmatprep.subr.mxu0 0.0
  %279 = vmatpush1.msra.mxu0 0.0
  %280 = vmatprep.subr.mxu0 0.0
  %281 = vmatpush1.msra.mxu0 0.0
  %282 = vmatprep.subr.mxu0 0.0
  %283 = vmatpush1.msra.mxu0 0.0
  %284 = vmatprep.subr.mxu0 0.0
  %285 = vmatpush1.msra.mxu0 0.0
  %286 = vmatprep.subr.mxu0 0.0
  %287 = vmatpush1.msra.mxu0 0.0
  %288 = vmatprep.subr.mxu0 0.0
  %289 = vmatpush1.msra.mxu0 0.0
  %290 = vmatprep.subr.mxu0 0.0
  %291 = vmatpush1.msra.mxu0 0.0
  %292 = vmatprep.subr.mxu0 0.0
  %293 = vmatpush1.msra.mxu0 0.0
  %294 = vmatprep.subr.mxu0 0.0
  %295 = vmatpush1.msra.mxu0 0.0
  %296 = vmatprep.subr.mxu0 0.0
  %297 = vmatpush1.msra.mxu0 0.0
  %298 = vmatprep.subr.mxu0 0.0
  %299 = vmatpush1.msra.mxu0 0.0
  %300 = vmatprep.subr.mxu0 0.0
  %301 = vmatpush1.msra.mxu0 0.0
  %302 = vmatprep.subr.mxu0 0.0
  %303 = vmatpush1.msra.mxu0 0.0
  %304 = vmatprep.subr.mxu0 0.0
  %305 = vmatpush1.msra.mxu0 0.0
  %306 = vmatprep.subr.mxu0 0.0
  %307 = vmatpush1.msra.mxu0 0.0
  %308 = vmatprep.subr.mxu0 0.0
  %309 = vmatpush1.msra.mxu0 0.0
  %310 = vmatprep.subr.mxu0 0.0
  %311 = vmatpush1.msra.mxu0 0.0
  %312 = vmatprep.subr.mxu0 0.0
  %313 = vmatpush1.msra.mxu0 0.0
  %314 = vmatprep.subr.mxu0 0.0
  %315 = vmatpush1.msra.mxu0 0.0
  %316 = vmatprep.subr.mxu0 0.0
  %317 = vmatpush1.msra.mxu0 0.0
  %318 = vmatprep.subr.mxu0 0.0
  %319 = vmatpush1.msra.mxu0 0.0
  %320 = vmatprep.subr.mxu0 0.0
  %321 = vmatpush1.msra.mxu0 0.0
  %322 = vmatprep.subr.mxu0 0.0
  %323 = vmatpush1.msra.mxu0 0.0
  %324 = vmatprep.subr.mxu0 0.0
  %325 = vmatpush1.msra.mxu0 0.0
  %326 = vmatprep.subr.mxu0 0.0
  %327 = vmatpush1.msra.mxu0 0.0
  %328 = vmatprep.mubr.f32.mxu0 0.0
  %329 = vmatmul.mubr.f32.gmra.mrb[0].mxu0 %v258
  %v330 = vpop.f32.mrb[0].mxu0
  %v331 = vadd.f32 %v255, %v330
  %v332 = vpop.f32.mrb[0].mxu0
  %333 = vdwg.mxu0
  %v334 = vmax.f32 %v331, 0.0
  %vm335 = vcmask 59392
  %336 = vst.msk [vmem:[%s4] sm:$0x7] %vm335, %v334
  // Predicated region
  $region18: #{graph_unet_forward.7} parent=0 // pred_check
    _
  $region19: #{graph_unet_forward.7} parent=0 // pred_check_branch
    %338 = sbr.rel (0) target = $region21
  $region20: #{graph_unet_forward.7} parent=0 // pred_region
    _
  $region21: #{graph_unet_forward.7} parent=0 // pred_fallthru
    _
  // Predicated region
  $region22: #{graph_unet_forward.7} parent=0 // pred_check
    _
  $region23: #{graph_unet_forward.7} parent=0 // pred_check_branch
    %340 = sbr.rel (0) target = $region25
  $region24: #{graph_unet_forward.7} parent=0 // pred_region
    _
  $region25: #{graph_unet_forward.7} parent=0 // pred_fallthru
    _

// kernel: graph_unet_forward.8
$region0: #{graph_unet_forward.8}
  #allocation0 [shape = 'u32[]', space=smem, size = 0x4, offset = 0x4, fixed_abs, tag = 'smem constant byte address 0x4 - core index']
  #allocation1 [shape = 'u32[144,128]{1,0:T(1,128)}', space=vmem, size = 0x12000, scoped, tag = 'internal scratch']
  %s0 = inlined_call_operand.vmem [shape: f32[8,8], index: 0, kind: input, shape index: {}]
  %s1 = inlined_call_operand.vmem [shape: f32[1,8], index: 1, kind: input, shape index: {}]
  %s2 = inlined_call_operand.vmem [shape: f32[3,8], index: 2, kind: input, shape index: {}, may-alias: {2,3}]
  %s3 = inlined_call_operand.vmem [shape: f32[3,8], index: 3, kind: input, shape index: {}, may-alias: {2,3}]
  %s4 = inlined_call_operand.vmem [shape: f32[3,8], index: 4, kind: input, shape index: {}]
  %s5 = inlined_call_operand.vmem [shape: f32[3,4], index: 5, kind: input, shape index: {}]
  %s6 = inlined_call_operand.vmem [shape: f32[3,8], index: 6, kind: output, shape index: {}]
  %s7 = sld [smem:[#allocation0]]
  $region34: #{graph_unet_forward.8} parent=0
    _
  %s9 = ssub.s32 1, %s7
  %s10 = scalar_select 0, %s9, %s7
  // Predicated region
  $region2: #{graph_unet_forward.8} parent=0 // pred_check
    _
  $region3: #{graph_unet_forward.8} parent=0 // pred_check_branch
    %12 = sbr.rel (0) target = $region5
  $region4: #{graph_unet_forward.8} parent=0 // pred_region
    _
  $region5: #{graph_unet_forward.8} parent=0 // pred_fallthru
    _
  // Predicated region
  $region6: #{graph_unet_forward.8} parent=0 // pred_check
    _
  $region7: #{graph_unet_forward.8} parent=0 // pred_check_branch
    %14 = sbr.rel (0) target = $region9
  $region8: #{graph_unet_forward.8} parent=0 // pred_region
    _
  $region9: #{graph_unet_forward.8} parent=0 // pred_fallthru
    _
  // Predicated region
  $region10: #{graph_unet_forward.8} parent=0 // pred_check
    _
  $region11: #{graph_unet_forward.8} parent=0 // pred_check_branch
    %16 = sbr.rel (0) target = $region13
  $region12: #{graph_unet_forward.8} parent=0 // pred_region
    _
  $region13: #{graph_unet_forward.8} parent=0 // pred_fallthru
    _
  // Predicated region
  $region14: #{graph_unet_forward.8} parent=0 // pred_check
    _
  $region15: #{graph_unet_forward.8} parent=0 // pred_check_branch
    %18 = sbr.rel (0) target = $region17
  $region16: #{graph_unet_forward.8} parent=0 // pred_region
    _
  $region17: #{graph_unet_forward.8} parent=0 // pred_fallthru
    _
  // Predicated region
  $region18: #{graph_unet_forward.8} parent=0 // pred_check
    _
  $region19: #{graph_unet_forward.8} parent=0 // pred_check_branch
    %20 = sbr.rel (0) target = $region21
  $region20: #{graph_unet_forward.8} parent=0 // pred_region
    _
  $region21: #{graph_unet_forward.8} parent=0 // pred_fallthru
    _
  // Predicated region
  $region22: #{graph_unet_forward.8} parent=0 // pred_check
    _
  $region23: #{graph_unet_forward.8} parent=0 // pred_check_branch
    %22 = sbr.rel (0) target = $region25
  $region24: #{graph_unet_forward.8} parent=0 // pred_region
    _
  $region25: #{graph_unet_forward.8} parent=0 // pred_fallthru
    _
  %v23 = vld [vmem:[%s5] sm:$0x7]
  %v24 = vld [vmem:[%s0] sm:$0xff]
  %v25 = vld [vmem:[%s1] sm:$0x1]
  %v26 = vld [vmem:[%s2] sm:$0x7]
  %v27 = vld [vmem:[%s3] sm:$0x7]
  %v28 = vmul.f32 %v27, 2.0
  %vm29 = vcmask 64512
  %v31 = vsel %vm29, %v26, 0
  %v34 = vsel %vm29, %v24, 0
  %36 = vmatprep.subr.mxu0 0.0
  %37 = vmatpush1.xpose.msra.mxu0 %v34
  %38 = vmatprep.subr.mxu0 0.0
  %39 = vmatpush1.xpose.msra.mxu0 0.0
  %40 = vmatprep.subr.mxu0 0.0
  %41 = vmatpush1.xpose.msra.mxu0 0.0
  %42 = vmatprep.subr.mxu0 0.0
  %43 = vmatpush1.xpose.msra.mxu0 0.0
  %44 = vmatprep.subr.mxu0 0.0
  %45 = vmatpush1.xpose.msra.mxu0 0.0
  %46 = vmatprep.subr.mxu0 0.0
  %47 = vmatpush1.xpose.msra.mxu0 0.0
  %48 = vmatprep.subr.mxu0 0.0
  %49 = vmatpush1.xpose.msra.mxu0 0.0
  %50 = vmatprep.subr.mxu0 0.0
  %51 = vmatpush1.xpose.msra.mxu0 0.0
  %52 = vmatprep.subr.mxu0 0.0
  %53 = vmatpush1.xpose.msra.mxu0 0.0
  %54 = vmatprep.subr.mxu0 0.0
  %55 = vmatpush1.xpose.msra.mxu0 0.0
  %56 = vmatprep.subr.mxu0 0.0
  %57 = vmatpush1.xpose.msra.mxu0 0.0
  %58 = vmatprep.subr.mxu0 0.0
  %59 = vmatpush1.xpose.msra.mxu0 0.0
  %60 = vmatprep.subr.mxu0 0.0
  %61 = vmatpush1.xpose.msra.mxu0 0.0
  %62 = vmatprep.subr.mxu0 0.0
  %63 = vmatpush1.xpose.msra.mxu0 0.0
  %64 = vmatprep.subr.mxu0 0.0
  %65 = vmatpush1.xpose.msra.mxu0 0.0
  %66 = vmatprep.subr.mxu0 0.0
  %67 = vmatpush1.xpose.msra.mxu0 0.0
  %68 = vmatprep.subr.mxu0 0.0
  %69 = vmatpush1.xpose.msra.mxu0 0.0
  %70 = vmatprep.subr.mxu0 0.0
  %71 = vmatpush1.xpose.msra.mxu0 0.0
  %72 = vmatprep.subr.mxu0 0.0
  %73 = vmatpush1.xpose.msra.mxu0 0.0
  %74 = vmatprep.subr.mxu0 0.0
  %75 = vmatpush1.xpose.msra.mxu0 0.0
  %76 = vmatprep.subr.mxu0 0.0
  %77 = vmatpush1.xpose.msra.mxu0 0.0
  %78 = vmatprep.subr.mxu0 0.0
  %79 = vmatpush1.xpose.msra.mxu0 0.0
  %80 = vmatprep.subr.mxu0 0.0
  %81 = vmatpush1.xpose.msra.mxu0 0.0
  %82 = vmatprep.subr.mxu0 0.0
  %83 = vmatpush1.xpose.msra.mxu0 0.0
  %84 = vmatprep.subr.mxu0 0.0
  %85 = vmatpush1.xpose.msra.mxu0 0.0
  %86 = vmatprep.subr.mxu0 0.0
  %87 = vmatpush1.xpose.msra.mxu0 0.0
  %88 = vmatprep.subr.mxu0 0.0
  %89 = vmatpush1.xpose.msra.mxu0 0.0
  %90 = vmatprep.subr.mxu0 0.0
  %91 = vmatpush1.xpose.msra.mxu0 0.0
  %92 = vmatprep.subr.mxu0 0.0
  %93 = vmatpush1.xpose.msra.mxu0 0.0
  %94 = vmatprep.subr.mxu0 0.0
  %95 = vmatpush1.xpose.msra.mxu0 0.0
  %96 = vmatprep.subr.mxu0 0.0
  %97 = vmatpush1.xpose.msra.mxu0 0.0
  %98 = vmatprep.subr.mxu0 0.0
  %99 = vmatpush1.xpose.msra.mxu0 0.0
  %100 = vmatprep.mubr.f32.mxu0 0.0
  %101 = vmatmul.mubr.f32.gmra.mrb[0].mxu0 %v31
  %v102 = vpop.f32.mrb[0].mxu0
  %v103 = vadd.f32 %v28, %v102
  %v104 = vpop.f32.mrb[0].mxu0
  %105 = vdwg.mxu0
  %v107 = vlaneseq
  %v108 = vshrl.u32 %v107, 7
  %v109 = vsub.s32 0, %v108
  %v110 = vrot.slane %v25, %v109
  %v112 = vmul.f32 %v110, %v103
  %114 = vset.pattern.permute.xlu0 3
  %115 = vperm.xlu0 %114, %v23
  %v116 = vpop.permute.xlu0 %115
  %vm118 = vcmask 23552
  %v119 = vsel %vm118, %v23, 0
  %vm121 = vcmask 1042432
  %v123 = vsel %vm121, %v112, 0
  %125 = vmatprep.subr.mxu0 0.0
  %126 = vmatpush1.msra.mxu0 %v123
  %127 = vmatprep.subr.mxu0 0.0
  %128 = vmatpush1.msra.mxu0 0.0
  %129 = vmatprep.subr.mxu0 0.0
  %130 = vmatpush1.msra.mxu0 0.0
  %131 = vmatprep.subr.mxu0 0.0
  %132 = vmatpush1.msra.mxu0 0.0
  %133 = vmatprep.subr.mxu0 0.0
  %134 = vmatpush1.msra.mxu0 0.0
  %135 = vmatprep.subr.mxu0 0.0
  %136 = vmatpush1.msra.mxu0 0.0
  %137 = vmatprep.subr.mxu0 0.0
  %138 = vmatpush1.msra.mxu0 0.0
  %139 = vmatprep.subr.mxu0 0.0
  %140 = vmatpush1.msra.mxu0 0.0
  %141 = vmatprep.subr.mxu0 0.0
  %142 = vmatpush1.msra.mxu0 0.0
  %143 = vmatprep.subr.mxu0 0.0
  %144 = vmatpush1.msra.mxu0 0.0
  %145 = vmatprep.subr.mxu0 0.0
  %146 = vmatpush1.msra.mxu0 0.0
  %147 = vmatprep.subr.mxu0 0.0
  %148 = vmatpush1.msra.mxu0 0.0
  %149 = vmatprep.subr.mxu0 0.0
  %150 = vmatpush1.msra.mxu0 0.0
  %151 = vmatprep.subr.mxu0 0.0
  %152 = vmatpush1.msra.mxu0 0.0
  %153 = vmatprep.subr.mxu0 0.0
  %154 = vmatpush1.msra.mxu0 0.0
  %155 = vmatprep.subr.mxu0 0.0
  %156 = vmatpush1.msra.mxu0 0.0
  %157 = vmatprep.subr.mxu0 0.0
  %158 = vmatpush1.msra.mxu0 0.0
  %159 = vmatprep.subr.mxu0 0.0
  %160 = vmatpush1.msra.mxu0 0.0
  %161 = vmatprep.subr.mxu0 0.0
  %162 = vmatpush1.msra.mxu0 0.0
  %163 = vmatprep.subr.mxu0 0.0
  %164 = vmatpush1.msra.mxu0 0.0
  %165 = vmatprep.subr.mxu0 0.0
  %166 = vmatpush1.msra.mxu0 0.0
  %167 = vmatprep.subr.mxu0 0.0
  %168 = vmatpush1.msra.mxu0 0.0
  %169 = vmatprep.subr.mxu0 0.0
  %170 = vmatpush1.msra.mxu0 0.0
  %171 = vmatprep.subr.mxu0 0.0
  %172 = vmatpush1.msra.mxu0 0.0
  %173 = vmatprep.subr.mxu0 0.0
  %174 = vmatpush1.msra.mxu0 0.0
  %175 = vmatprep.subr.mxu0 0.0
  %176 = vmatpush1.msra.mxu0 0.0
  %177 = vmatprep.subr.mxu0 0.0
  %178 = vmatpush1.msra.mxu0 0.0
  %179 = vmatprep.subr.mxu0 0.0
  %180 = vmatpush1.msra.mxu0 0.0
  %181 = vmatprep.subr.mxu0 0.0
  %182 = vmatpush1.msra.mxu0 0.0
  %183 = vmatprep.subr.mxu0 0.0
  %184 = vmatpush1.msra.mxu0 0.0
  %185 = vmatprep.subr.mxu0 0.0
  %186 = vmatpush1.msra.mxu0 0.0
  %187 = vmatprep.subr.mxu0 0.0
  %188 = vmatpush1.msra.mxu0 0.0
  %189 = vmatprep.mubr.f32.mxu0 0.0
  %190 = vmatmul.mubr.f32.gmra.mrb[0].mxu0 %v119
  %v191 = vpop.f32.mrb[0].mxu0
  %v192 = vadd.f32 %v116, %v191
  %v193 = vpop.f32.mrb[0].mxu0
  %194 = vdwg.mxu0
  %v195 = vmax.f32 %v192, 0.0
  %v196 = vld [vmem:[%s4] sm:$0x7]
  %v197 = vadd.f32 %v195, %v196
  %vm198 = vcmask 59392
  %199 = vst.msk [vmem:[%s6] sm:$0x7] %vm198, %v197
  // Predicated region
  $region26: #{graph_unet_forward.8} parent=0 // pred_check
    _
  $region27: #{graph_unet_forward.8} parent=0 // pred_check_branch
    %201 = sbr.rel (0) target = $region29
  $region28: #{graph_unet_forward.8} parent=0 // pred_region
    _
  $region29: #{graph_unet_forward.8} parent=0 // pred_fallthru
    _
  // Predicated region
  $region30: #{graph_unet_forward.8} parent=0 // pred_check
    _
  $region31: #{graph_unet_forward.8} parent=0 // pred_check_branch
    %203 = sbr.rel (0) target = $region33
  $region32: #{graph_unet_forward.8} parent=0 // pred_region
    _
  $region33: #{graph_unet_forward.8} parent=0 // pred_fallthru
    _

</llo_original>
